<compile_context>
chip_gen: v5e
topology: v5e:2x2
jax: 0.10.0
libtpu: 0.0.40
codegen_flags: <defaults>
</compile_context>

<pallas_src>
import jax
import jax.numpy as jnp
from jax.experimental import pallas as pl
from jax.experimental.pallas import tpu as pltpu

# ---------------- configuration (small shapes implied by the module) ----------------
B = 2                          # batch size
GRID_H, GRID_W = 4, 4          # graph is a 4x4 grid -> n = 16 nodes
N = GRID_H * GRID_W            # tokens / nodes
DIM = 64                       # node representation size d
DEPTH = 2
HEADS = 2
DIM_HEAD = 16
INNER = HEADS * DIM_HEAD       # 32
TAU = 0.5                      # TransformerD default tau
TV_EPS = 1e-10                 # epsilon passed to tv_subtracted_term in forward()
LN_EPS = 1e-5                  # nn.LayerNorm default eps
SCALE = DIM_HEAD ** -0.5


# ---------------- kernel helpers ----------------
def _layernorm(x, g, b):
    mu = jnp.mean(x, axis=-1, keepdims=True)
    var = jnp.mean((x - mu) ** 2, axis=-1, keepdims=True)
    return (x - mu) * jax.lax.rsqrt(var + LN_EPS) * g + b


# ---------------- the fused Pallas kernel ----------------
def transformer_d_kernel(x_ref, ab_ref, abt_ref, lng_ref, lnb_ref,
                         wqkv_ref, wo_ref, wff_ref, bff_ref, o_ref):
    """Whole TransformerD forward.

    x_ref: (B*N, DIM)                 activations, batch folded into sublanes
    ab_ref / abt_ref: (B*N, B*N)      kron(I_B, A) and its transpose
    lng/lnb: (DEPTH, 1, DIM)          per-layer LayerNorm affine
    wqkv: (DEPTH, DIM, 3*INNER)       fused [Wq | Wk | Wv] (v weight-norm folded)
    wo:   (DEPTH, INNER, DIM)         attention output projection
    wff:  (DEPTH, DIM, DIM)           feed-forward weight (weight-norm folded)
    bff:  (DEPTH, 1, DIM)             feed-forward bias
    """
    x = x_ref[...]                        # (B*N, DIM) f32
    Ab = ab_ref[...]                      # block-diagonal adjacency
    # tau * (A^T @ G) == (tau * A^T) @ G : fold tau once (1 vreg) instead of scaling
    # the (B*N, DIM) div_term in each of the 2*DEPTH tv_term calls.
    AbT_tau = TAU * abt_ref[...]
    inv_1p_eps = 1.0 / (1.0 + TV_EPS)     # compile-time constant

    def tv_term(xc):
        # tv_subtracted_term(X, lambda_=TAU, epsilon=TV_EPS, A), on the flattened batch.
        ax = jnp.dot(Ab, xc, preferred_element_type=jnp.float32)
        x_eps = (xc - TV_EPS * ax) * inv_1p_eps
        g = jnp.dot(Ab, x_eps, preferred_element_type=jnp.float32) - x_eps
        nrm = jnp.sqrt(jnp.sum(g * g, axis=-1, keepdims=True))     # torch.norm(dim=2)
        return jnp.dot(AbT_tau, g / (nrm + 1e-10), preferred_element_type=jnp.float32)

    for l in range(DEPTH):                # static unroll; weights stay resident in VMEM
        # ---- Attention: LayerNorm -> fused QKV matmul -> per-head softmax -> out proj
        xn = _layernorm(x, lng_ref[l], lnb_ref[l])
        qkv = jnp.dot(xn, wqkv_ref[l], preferred_element_type=jnp.float32)  # (B*N, 3*INNER)

        batch_outs = []
        for b in range(B):                # tiny static unrolls (B*HEADS = 4 blocks)
            r0 = b * N
            head_outs = []
            for h in range(HEADS):
                c = h * DIM_HEAD
                q = qkv[r0:r0 + N, c:c + DIM_HEAD]
                k = qkv[r0:r0 + N, INNER + c:INNER + c + DIM_HEAD]
                v = qkv[r0:r0 + N, 2 * INNER + c:2 * INNER + c + DIM_HEAD]
                dots = jax.lax.dot_general(q, k, (((1,), (1,)), ((), ())),
                                           preferred_element_type=jnp.float32) * SCALE
                dots = dots - jnp.max(dots, axis=-1, keepdims=True)
                e = jnp.exp(dots)
                p = e * pl.reciprocal(jnp.sum(e, axis=-1, keepdims=True), approx=True)
                head_outs.append(jnp.dot(p, v, preferred_element_type=jnp.float32))
            batch_outs.append(jnp.concatenate(head_outs, axis=-1))           # (N, INNER)
        attn = jnp.concatenate(batch_outs, axis=0)                           # (B*N, INNER)
        attn = jnp.dot(attn, wo_ref[l], preferred_element_type=jnp.float32)  # (B*N, DIM)

        x = TAU * attn + x                # x = tau * attn(x) + x
        x = x - tv_term(x)                # x = x - tv_subtracted_term(x, tau, 1e-10, A)

        # ---- Feed-forward: plain Linear(dim, dim) with bias (weight-norm folded) ----
        ff = jnp.dot(x, wff_ref[l], preferred_element_type=jnp.float32) + bff_ref[l]
        x = TAU * ff + x                  # x = tau * ff(x) + x
        x = x - tv_term(x)

    o_ref[...] = x                        # single sublane-dense writeback


# ---------------- pallas_call wrapper ----------------
@jax.jit
def transformer_d(x, adj, params):
    b, n, d = x.shape
    # Block-diagonal adjacency: all per-batch A @ X_b products become one 2-D matmul.
    ab = jnp.kron(jnp.eye(b, dtype=x.dtype), adj)
    vmem = lambda: pl.BlockSpec(memory_space=pltpu.MemorySpace.VMEM)
    out2d = pl.pallas_call(
        transformer_d_kernel,
        out_shape=jax.ShapeDtypeStruct((b * n, d), jnp.float32),
        in_specs=[vmem() for _ in range(9)],
        out_specs=vmem(),
    )(x.reshape(b * n, d), ab, ab.T,
      params["ln_g"], params["ln_b"], params["wqkv"],
      params["wo"], params["wff"], params["bff"])
    return out2d.reshape(b, n, d)


# ---------------- plain-JAX setup glue ----------------
def grid_adjacency(h, w):
    """4-neighbour adjacency of an h x w grid graph (the module's `grid` kwarg)."""
    idx = jnp.arange(h * w)
    r, c = idx // w, idx % w
    man = jnp.abs(r[:, None] - r[None, :]) + jnp.abs(c[:, None] - c[None, :])
    return (man == 1).astype(jnp.float32)


def _weight_norm_fold(v, g):
    """nn.utils.weight_norm (dim=0): effective W = g * V / ||V|| (per output unit).
    Weights here are stored as (in, out) == PyTorch W.T, so the norm is per column.
    Folding at init is exact for the forward pass (pure reparameterisation)."""
    return g * v * jax.lax.rsqrt(jnp.sum(v * v, axis=0, keepdims=True) + 1e-12)


def init_params(key):
    keys = iter(jax.random.split(key, DEPTH * 7))

    def nrm(shape, fan_in):
        return jax.random.normal(next(keys), shape, jnp.float32) / jnp.sqrt(fan_in)

    def pos(shape):
        return jnp.exp(0.1 * jax.random.normal(next(keys), shape, jnp.float32))

    ln_g, ln_b, wqkv, wo, wff, bff = [], [], [], [], [], []
    for _ in range(DEPTH):
        wq = nrm((DIM, INNER), DIM)                               # plain Linear (no bias)
        wk = nrm((DIM, INNER), DIM)                               # plain Linear (no bias)
        wv = _weight_norm_fold(nrm((DIM, INNER), DIM), pos((1, INNER)))   # weight-normed v
        w_out = nrm((INNER, DIM), INNER)                          # to_out (no bias)
        w_ff = _weight_norm_fold(nrm((DIM, DIM), DIM), pos((1, DIM)))     # weight-normed ff
        ln_g.append(jnp.ones((1, DIM), jnp.float32))
        ln_b.append(jnp.zeros((1, DIM), jnp.float32))
        wqkv.append(jnp.concatenate([wq, wk, wv], axis=1))        # fused (DIM, 3*INNER)
        wo.append(w_out)
        wff.append(w_ff)
        bff.append(jnp.zeros((1, DIM), jnp.float32))

    stack = lambda xs: jnp.stack(xs, axis=0)                      # leading DEPTH axis
    return {"ln_g": stack(ln_g), "ln_b": stack(ln_b), "wqkv": stack(wqkv),
            "wo": stack(wo), "wff": stack(wff), "bff": stack(bff)}


if __name__ == "__main__":
    root = jax.random.PRNGKey(0)
    kp, kx = jax.random.split(root)
    params = init_params(kp)
    adj = grid_adjacency(GRID_H, GRID_W)                          # (N, N) adjacency
    x = jax.random.normal(kx, (B, N, DIM), jnp.float32)           # (b, n, d) node features
    out = transformer_d(x, adj, params)
    jax.block_until_ready(out)
    assert out.shape == (B, N, DIM)
    assert bool(jnp.all(jnp.isfinite(out)))
    print("KERNEL_OK")
</pallas_src>

<mosaic_0001>
module attributes {stable_mosaic.version = 11 : i64} {
  func.func @transformer_d_kernel(%arg0: memref<32x64xf32, #tpu.memory_space<vmem>>, %arg1: memref<32x32xf32, #tpu.memory_space<vmem>>, %arg2: memref<32x32xf32, #tpu.memory_space<vmem>>, %arg3: memref<2x1x64xf32, #tpu.memory_space<vmem>>, %arg4: memref<2x1x64xf32, #tpu.memory_space<vmem>>, %arg5: memref<2x64x96xf32, #tpu.memory_space<vmem>>, %arg6: memref<2x32x64xf32, #tpu.memory_space<vmem>>, %arg7: memref<2x64x64xf32, #tpu.memory_space<vmem>>, %arg8: memref<2x1x64xf32, #tpu.memory_space<vmem>>, %arg9: memref<32x64xf32, #tpu.memory_space<vmem>>) attributes {dimension_semantics = [], scalar_prefetch = 0 : i64, scratch_operands = 0 : i64, tpu.core_type = #tpu.core_type<tc>} {
    %c0 = arith.constant 0 : index
    %c0_0 = arith.constant 0 : index
    %0 = vector.load %arg0[%c0, %c0_0] : memref<32x64xf32, #tpu.memory_space<vmem>>, vector<32x64xf32>
    %c0_1 = arith.constant 0 : index
    %c0_2 = arith.constant 0 : index
    %1 = vector.load %arg1[%c0_1, %c0_2] : memref<32x32xf32, #tpu.memory_space<vmem>>, vector<32x32xf32>
    %c0_3 = arith.constant 0 : index
    %c0_4 = arith.constant 0 : index
    %2 = vector.load %arg2[%c0_3, %c0_4] : memref<32x32xf32, #tpu.memory_space<vmem>>, vector<32x32xf32>
    %cst = arith.constant 5.000000e-01 : f32
    %3 = vector.broadcast %cst : f32 to vector<32x32xf32>
    %4 = arith.mulf %3, %2 : vector<32x32xf32>
    %c0_5 = arith.constant 0 : index
    %c0_6 = arith.constant 0 : index
    %c0_7 = arith.constant 0 : index
    %5 = vector.load %arg3[%c0_5, %c0_6, %c0_7] : memref<2x1x64xf32, #tpu.memory_space<vmem>>, vector<1x1x64xf32>
    %6 = vector.shape_cast %5 : vector<1x1x64xf32> to vector<1x64xf32>
    %c0_8 = arith.constant 0 : index
    %c0_9 = arith.constant 0 : index
    %c0_10 = arith.constant 0 : index
    %7 = vector.load %arg4[%c0_8, %c0_9, %c0_10] : memref<2x1x64xf32, #tpu.memory_space<vmem>>, vector<1x1x64xf32>
    %8 = vector.shape_cast %7 : vector<1x1x64xf32> to vector<1x64xf32>
    %cst_11 = arith.constant dense<0.000000e+00> : vector<32xf32>
    %9 = vector.multi_reduction <add>, %0, %cst_11 [1] : vector<32x64xf32> to vector<32xf32>
    %10 = vector.shape_cast %9 : vector<32xf32> to vector<32x1xf32>
    %cst_12 = arith.constant 6.400000e+01 : f32
    %11 = vector.broadcast %cst_12 : f32 to vector<32x1xf32>
    %12 = arith.divf %10, %11 : vector<32x1xf32>
    %13 = vector.broadcast %12 : vector<32x1xf32> to vector<32x64xf32>
    %14 = arith.subf %0, %13 : vector<32x64xf32>
    %15 = arith.mulf %14, %14 : vector<32x64xf32>
    %cst_13 = arith.constant dense<0.000000e+00> : vector<32xf32>
    %16 = vector.multi_reduction <add>, %15, %cst_13 [1] : vector<32x64xf32> to vector<32xf32>
    %17 = vector.shape_cast %16 : vector<32xf32> to vector<32x1xf32>
    %cst_14 = arith.constant 6.400000e+01 : f32
    %18 = vector.broadcast %cst_14 : f32 to vector<32x1xf32>
    %19 = arith.divf %17, %18 : vector<32x1xf32>
    %20 = vector.broadcast %12 : vector<32x1xf32> to vector<32x64xf32>
    %21 = arith.subf %0, %20 : vector<32x64xf32>
    %cst_15 = arith.constant 9.99999974E-6 : f32
    %22 = vector.broadcast %cst_15 : f32 to vector<32x1xf32>
    %23 = arith.addf %19, %22 : vector<32x1xf32>
    %24 = math.rsqrt %23 : vector<32x1xf32>
    %25 = vector.broadcast %24 : vector<32x1xf32> to vector<32x64xf32>
    %26 = arith.mulf %21, %25 : vector<32x64xf32>
    %27 = vector.broadcast %6 : vector<1x64xf32> to vector<32x64xf32>
    %28 = arith.mulf %26, %27 : vector<32x64xf32>
    %29 = vector.broadcast %8 : vector<1x64xf32> to vector<32x64xf32>
    %30 = arith.addf %28, %29 : vector<32x64xf32>
    %c0_16 = arith.constant 0 : index
    %c0_17 = arith.constant 0 : index
    %c0_18 = arith.constant 0 : index
    %31 = vector.load %arg5[%c0_16, %c0_17, %c0_18] : memref<2x64x96xf32, #tpu.memory_space<vmem>>, vector<1x64x96xf32>
    %32 = vector.shape_cast %31 : vector<1x64x96xf32> to vector<64x96xf32>
    %cst_19 = arith.constant dense<0.000000e+00> : vector<32x96xf32>
    %33 = tpu.matmul %30, %32, %cst_19 {dimension_numbers = #tpu.dot_dimension_numbers<[1], [0], [0], [1], [0, 0, 1, 1], [], []>} : vector<32x64xf32>, vector<64x96xf32>, vector<32x96xf32> -> vector<32x96xf32>
    %34 = vector.extract_strided_slice %33 {offsets = [0, 0], sizes = [16, 16], strides = [1, 1]} : vector<32x96xf32> to vector<16x16xf32>
    %35 = vector.extract_strided_slice %33 {offsets = [0, 32], sizes = [16, 16], strides = [1, 1]} : vector<32x96xf32> to vector<16x16xf32>
    %36 = vector.extract_strided_slice %33 {offsets = [0, 64], sizes = [16, 16], strides = [1, 1]} : vector<32x96xf32> to vector<16x16xf32>
    %cst_20 = arith.constant dense<0.000000e+00> : vector<16x16xf32>
    %37 = tpu.matmul %34, %35, %cst_20 {dimension_numbers = #tpu.dot_dimension_numbers<[1], [1], [0], [0], [0, 0, 1, 0], [], []>} : vector<16x16xf32>, vector<16x16xf32>, vector<16x16xf32> -> vector<16x16xf32>
    %cst_21 = arith.constant 2.500000e-01 : f32
    %38 = vector.broadcast %cst_21 : f32 to vector<16x16xf32>
    %39 = arith.mulf %37, %38 : vector<16x16xf32>
    %cst_22 = arith.constant dense<0xFF800000> : vector<16xf32>
    %40 = vector.multi_reduction <maximumf>, %39, %cst_22 [1] : vector<16x16xf32> to vector<16xf32>
    %41 = vector.shape_cast %40 : vector<16xf32> to vector<16x1xf32>
    %42 = vector.broadcast %41 : vector<16x1xf32> to vector<16x16xf32>
    %43 = arith.subf %39, %42 : vector<16x16xf32>
    %44 = math.exp %43 : vector<16x16xf32>
    %cst_23 = arith.constant dense<0.000000e+00> : vector<16xf32>
    %45 = vector.multi_reduction <add>, %44, %cst_23 [1] : vector<16x16xf32> to vector<16xf32>
    %46 = vector.shape_cast %45 : vector<16xf32> to vector<16x1xf32>
    %47 = tpu.reciprocal %46 {approx = true} : vector<16x1xf32> -> vector<16x1xf32>
    %48 = vector.broadcast %47 : vector<16x1xf32> to vector<16x16xf32>
    %49 = arith.mulf %44, %48 : vector<16x16xf32>
    %cst_24 = arith.constant dense<0.000000e+00> : vector<16x16xf32>
    %50 = tpu.matmul %49, %36, %cst_24 {dimension_numbers = #tpu.dot_dimension_numbers<[1], [0], [0], [1], [0, 0, 1, 1], [], []>} : vector<16x16xf32>, vector<16x16xf32>, vector<16x16xf32> -> vector<16x16xf32>
    %51 = vector.extract_strided_slice %33 {offsets = [0, 16], sizes = [16, 16], strides = [1, 1]} : vector<32x96xf32> to vector<16x16xf32>
    %52 = vector.extract_strided_slice %33 {offsets = [0, 48], sizes = [16, 16], strides = [1, 1]} : vector<32x96xf32> to vector<16x16xf32>
    %53 = vector.extract_strided_slice %33 {offsets = [0, 80], sizes = [16, 16], strides = [1, 1]} : vector<32x96xf32> to vector<16x16xf32>
    %cst_25 = arith.constant dense<0.000000e+00> : vector<16x16xf32>
    %54 = tpu.matmul %51, %52, %cst_25 {dimension_numbers = #tpu.dot_dimension_numbers<[1], [1], [0], [0], [0, 0, 1, 0], [], []>} : vector<16x16xf32>, vector<16x16xf32>, vector<16x16xf32> -> vector<16x16xf32>
    %cst_26 = arith.constant 2.500000e-01 : f32
    %55 = vector.broadcast %cst_26 : f32 to vector<16x16xf32>
    %56 = arith.mulf %54, %55 : vector<16x16xf32>
    %cst_27 = arith.constant dense<0xFF800000> : vector<16xf32>
    %57 = vector.multi_reduction <maximumf>, %56, %cst_27 [1] : vector<16x16xf32> to vector<16xf32>
    %58 = vector.shape_cast %57 : vector<16xf32> to vector<16x1xf32>
    %59 = vector.broadcast %58 : vector<16x1xf32> to vector<16x16xf32>
    %60 = arith.subf %56, %59 : vector<16x16xf32>
    %61 = math.exp %60 : vector<16x16xf32>
    %cst_28 = arith.constant dense<0.000000e+00> : vector<16xf32>
    %62 = vector.multi_reduction <add>, %61, %cst_28 [1] : vector<16x16xf32> to vector<16xf32>
    %63 = vector.shape_cast %62 : vector<16xf32> to vector<16x1xf32>
    %64 = tpu.reciprocal %63 {approx = true} : vector<16x1xf32> -> vector<16x1xf32>
    %65 = vector.broadcast %64 : vector<16x1xf32> to vector<16x16xf32>
    %66 = arith.mulf %61, %65 : vector<16x16xf32>
    %cst_29 = arith.constant dense<0.000000e+00> : vector<16x16xf32>
    %67 = tpu.matmul %66, %53, %cst_29 {dimension_numbers = #tpu.dot_dimension_numbers<[1], [0], [0], [1], [0, 0, 1, 1], [], []>} : vector<16x16xf32>, vector<16x16xf32>, vector<16x16xf32> -> vector<16x16xf32>
    %68 = tpu.concatenate %50, %67 in 1 : vector<16x16xf32>, vector<16x16xf32> -> vector<16x32xf32>
    %69 = vector.extract_strided_slice %33 {offsets = [16, 0], sizes = [16, 16], strides = [1, 1]} : vector<32x96xf32> to vector<16x16xf32>
    %70 = vector.extract_strided_slice %33 {offsets = [16, 32], sizes = [16, 16], strides = [1, 1]} : vector<32x96xf32> to vector<16x16xf32>
    %71 = vector.extract_strided_slice %33 {offsets = [16, 64], sizes = [16, 16], strides = [1, 1]} : vector<32x96xf32> to vector<16x16xf32>
    %cst_30 = arith.constant dense<0.000000e+00> : vector<16x16xf32>
    %72 = tpu.matmul %69, %70, %cst_30 {dimension_numbers = #tpu.dot_dimension_numbers<[1], [1], [0], [0], [0, 0, 1, 0], [], []>} : vector<16x16xf32>, vector<16x16xf32>, vector<16x16xf32> -> vector<16x16xf32>
    %cst_31 = arith.constant 2.500000e-01 : f32
    %73 = vector.broadcast %cst_31 : f32 to vector<16x16xf32>
    %74 = arith.mulf %72, %73 : vector<16x16xf32>
    %cst_32 = arith.constant dense<0xFF800000> : vector<16xf32>
    %75 = vector.multi_reduction <maximumf>, %74, %cst_32 [1] : vector<16x16xf32> to vector<16xf32>
    %76 = vector.shape_cast %75 : vector<16xf32> to vector<16x1xf32>
    %77 = vector.broadcast %76 : vector<16x1xf32> to vector<16x16xf32>
    %78 = arith.subf %74, %77 : vector<16x16xf32>
    %79 = math.exp %78 : vector<16x16xf32>
    %cst_33 = arith.constant dense<0.000000e+00> : vector<16xf32>
    %80 = vector.multi_reduction <add>, %79, %cst_33 [1] : vector<16x16xf32> to vector<16xf32>
    %81 = vector.shape_cast %80 : vector<16xf32> to vector<16x1xf32>
    %82 = tpu.reciprocal %81 {approx = true} : vector<16x1xf32> -> vector<16x1xf32>
    %83 = vector.broadcast %82 : vector<16x1xf32> to vector<16x16xf32>
    %84 = arith.mulf %79, %83 : vector<16x16xf32>
    %cst_34 = arith.constant dense<0.000000e+00> : vector<16x16xf32>
    %85 = tpu.matmul %84, %71, %cst_34 {dimension_numbers = #tpu.dot_dimension_numbers<[1], [0], [0], [1], [0, 0, 1, 1], [], []>} : vector<16x16xf32>, vector<16x16xf32>, vector<16x16xf32> -> vector<16x16xf32>
    %86 = vector.extract_strided_slice %33 {offsets = [16, 16], sizes = [16, 16], strides = [1, 1]} : vector<32x96xf32> to vector<16x16xf32>
    %87 = vector.extract_strided_slice %33 {offsets = [16, 48], sizes = [16, 16], strides = [1, 1]} : vector<32x96xf32> to vector<16x16xf32>
    %88 = vector.extract_strided_slice %33 {offsets = [16, 80], sizes = [16, 16], strides = [1, 1]} : vector<32x96xf32> to vector<16x16xf32>
    %cst_35 = arith.constant dense<0.000000e+00> : vector<16x16xf32>
    %89 = tpu.matmul %86, %87, %cst_35 {dimension_numbers = #tpu.dot_dimension_numbers<[1], [1], [0], [0], [0, 0, 1, 0], [], []>} : vector<16x16xf32>, vector<16x16xf32>, vector<16x16xf32> -> vector<16x16xf32>
    %cst_36 = arith.constant 2.500000e-01 : f32
    %90 = vector.broadcast %cst_36 : f32 to vector<16x16xf32>
    %91 = arith.mulf %89, %90 : vector<16x16xf32>
    %cst_37 = arith.constant dense<0xFF800000> : vector<16xf32>
    %92 = vector.multi_reduction <maximumf>, %91, %cst_37 [1] : vector<16x16xf32> to vector<16xf32>
    %93 = vector.shape_cast %92 : vector<16xf32> to vector<16x1xf32>
    %94 = vector.broadcast %93 : vector<16x1xf32> to vector<16x16xf32>
    %95 = arith.subf %91, %94 : vector<16x16xf32>
    %96 = math.exp %95 : vector<16x16xf32>
    %cst_38 = arith.constant dense<0.000000e+00> : vector<16xf32>
    %97 = vector.multi_reduction <add>, %96, %cst_38 [1] : vector<16x16xf32> to vector<16xf32>
    %98 = vector.shape_cast %97 : vector<16xf32> to vector<16x1xf32>
    %99 = tpu.reciprocal %98 {approx = true} : vector<16x1xf32> -> vector<16x1xf32>
    %100 = vector.broadcast %99 : vector<16x1xf32> to vector<16x16xf32>
    %101 = arith.mulf %96, %100 : vector<16x16xf32>
    %cst_39 = arith.constant dense<0.000000e+00> : vector<16x16xf32>
    %102 = tpu.matmul %101, %88, %cst_39 {dimension_numbers = #tpu.dot_dimension_numbers<[1], [0], [0], [1], [0, 0, 1, 1], [], []>} : vector<16x16xf32>, vector<16x16xf32>, vector<16x16xf32> -> vector<16x16xf32>
    %103 = tpu.concatenate %85, %102 in 1 : vector<16x16xf32>, vector<16x16xf32> -> vector<16x32xf32>
    %104 = tpu.concatenate %68, %103 in 0 : vector<16x32xf32>, vector<16x32xf32> -> vector<32x32xf32>
    %c0_40 = arith.constant 0 : index
    %c0_41 = arith.constant 0 : index
    %c0_42 = arith.constant 0 : index
    %105 = vector.load %arg6[%c0_40, %c0_41, %c0_42] : memref<2x32x64xf32, #tpu.memory_space<vmem>>, vector<1x32x64xf32>
    %106 = vector.shape_cast %105 : vector<1x32x64xf32> to vector<32x64xf32>
    %cst_43 = arith.constant dense<0.000000e+00> : vector<32x64xf32>
    %107 = tpu.matmul %104, %106, %cst_43 {dimension_numbers = #tpu.dot_dimension_numbers<[1], [0], [0], [1], [0, 0, 1, 1], [], []>} : vector<32x32xf32>, vector<32x64xf32>, vector<32x64xf32> -> vector<32x64xf32>
    %cst_44 = arith.constant 5.000000e-01 : f32
    %108 = vector.broadcast %cst_44 : f32 to vector<32x64xf32>
    %109 = arith.mulf %108, %107 : vector<32x64xf32>
    %110 = arith.addf %109, %0 : vector<32x64xf32>
    %cst_45 = arith.constant dense<0.000000e+00> : vector<32x64xf32>
    %111 = tpu.matmul %1, %110, %cst_45 {dimension_numbers = #tpu.dot_dimension_numbers<[1], [0], [0], [1], [0, 0, 1, 1], [], []>} : vector<32x32xf32>, vector<32x64xf32>, vector<32x64xf32> -> vector<32x64xf32>
    %cst_46 = arith.constant 1.000000e-10 : f32
    %112 = vector.broadcast %cst_46 : f32 to vector<32x64xf32>
    %113 = arith.mulf %112, %111 : vector<32x64xf32>
    %114 = arith.subf %110, %113 : vector<32x64xf32>
    %cst_47 = arith.constant 1.000000e+00 : f32
    %115 = vector.broadcast %cst_47 : f32 to vector<32x64xf32>
    %116 = arith.mulf %114, %115 : vector<32x64xf32>
    %cst_48 = arith.constant dense<0.000000e+00> : vector<32x64xf32>
    %117 = tpu.matmul %1, %116, %cst_48 {dimension_numbers = #tpu.dot_dimension_numbers<[1], [0], [0], [1], [0, 0, 1, 1], [], []>} : vector<32x32xf32>, vector<32x64xf32>, vector<32x64xf32> -> vector<32x64xf32>
    %118 = arith.subf %117, %116 : vector<32x64xf32>
    %119 = arith.mulf %118, %118 : vector<32x64xf32>
    %cst_49 = arith.constant dense<0.000000e+00> : vector<32xf32>
    %120 = vector.multi_reduction <add>, %119, %cst_49 [1] : vector<32x64xf32> to vector<32xf32>
    %121 = vector.shape_cast %120 : vector<32xf32> to vector<32x1xf32>
    %122 = math.sqrt %121 : vector<32x1xf32>
    %cst_50 = arith.constant 1.000000e-10 : f32
    %123 = vector.broadcast %cst_50 : f32 to vector<32x1xf32>
    %124 = arith.addf %122, %123 : vector<32x1xf32>
    %125 = vector.broadcast %124 : vector<32x1xf32> to vector<32x64xf32>
    %126 = arith.divf %118, %125 : vector<32x64xf32>
    %cst_51 = arith.constant dense<0.000000e+00> : vector<32x64xf32>
    %127 = tpu.matmul %4, %126, %cst_51 {dimension_numbers = #tpu.dot_dimension_numbers<[1], [0], [0], [1], [0, 0, 1, 1], [], []>} : vector<32x32xf32>, vector<32x64xf32>, vector<32x64xf32> -> vector<32x64xf32>
    %128 = arith.subf %110, %127 : vector<32x64xf32>
    %c0_52 = arith.constant 0 : index
    %c0_53 = arith.constant 0 : index
    %c0_54 = arith.constant 0 : index
    %129 = vector.load %arg7[%c0_52, %c0_53, %c0_54] : memref<2x64x64xf32, #tpu.memory_space<vmem>>, vector<1x64x64xf32>
    %130 = vector.shape_cast %129 : vector<1x64x64xf32> to vector<64x64xf32>
    %cst_55 = arith.constant dense<0.000000e+00> : vector<32x64xf32>
    %131 = tpu.matmul %128, %130, %cst_55 {dimension_numbers = #tpu.dot_dimension_numbers<[1], [0], [0], [1], [0, 0, 1, 1], [], []>} : vector<32x64xf32>, vector<64x64xf32>, vector<32x64xf32> -> vector<32x64xf32>
    %c0_56 = arith.constant 0 : index
    %c0_57 = arith.constant 0 : index
    %c0_58 = arith.constant 0 : index
    %132 = vector.load %arg8[%c0_56, %c0_57, %c0_58] : memref<2x1x64xf32, #tpu.memory_space<vmem>>, vector<1x1x64xf32>
    %133 = vector.shape_cast %132 : vector<1x1x64xf32> to vector<1x64xf32>
    %134 = vector.broadcast %133 : vector<1x64xf32> to vector<32x64xf32>
    %135 = arith.addf %131, %134 : vector<32x64xf32>
    %cst_59 = arith.constant 5.000000e-01 : f32
    %136 = vector.broadcast %cst_59 : f32 to vector<32x64xf32>
    %137 = arith.mulf %136, %135 : vector<32x64xf32>
    %138 = arith.addf %137, %128 : vector<32x64xf32>
    %cst_60 = arith.constant dense<0.000000e+00> : vector<32x64xf32>
    %139 = tpu.matmul %1, %138, %cst_60 {dimension_numbers = #tpu.dot_dimension_numbers<[1], [0], [0], [1], [0, 0, 1, 1], [], []>} : vector<32x32xf32>, vector<32x64xf32>, vector<32x64xf32> -> vector<32x64xf32>
    %cst_61 = arith.constant 1.000000e-10 : f32
    %140 = vector.broadcast %cst_61 : f32 to vector<32x64xf32>
    %141 = arith.mulf %140, %139 : vector<32x64xf32>
    %142 = arith.subf %138, %141 : vector<32x64xf32>
    %cst_62 = arith.constant 1.000000e+00 : f32
    %143 = vector.broadcast %cst_62 : f32 to vector<32x64xf32>
    %144 = arith.mulf %142, %143 : vector<32x64xf32>
    %cst_63 = arith.constant dense<0.000000e+00> : vector<32x64xf32>
    %145 = tpu.matmul %1, %144, %cst_63 {dimension_numbers = #tpu.dot_dimension_numbers<[1], [0], [0], [1], [0, 0, 1, 1], [], []>} : vector<32x32xf32>, vector<32x64xf32>, vector<32x64xf32> -> vector<32x64xf32>
    %146 = arith.subf %145, %144 : vector<32x64xf32>
    %147 = arith.mulf %146, %146 : vector<32x64xf32>
    %cst_64 = arith.constant dense<0.000000e+00> : vector<32xf32>
    %148 = vector.multi_reduction <add>, %147, %cst_64 [1] : vector<32x64xf32> to vector<32xf32>
    %149 = vector.shape_cast %148 : vector<32xf32> to vector<32x1xf32>
    %150 = math.sqrt %149 : vector<32x1xf32>
    %cst_65 = arith.constant 1.000000e-10 : f32
    %151 = vector.broadcast %cst_65 : f32 to vector<32x1xf32>
    %152 = arith.addf %150, %151 : vector<32x1xf32>
    %153 = vector.broadcast %152 : vector<32x1xf32> to vector<32x64xf32>
    %154 = arith.divf %146, %153 : vector<32x64xf32>
    %cst_66 = arith.constant dense<0.000000e+00> : vector<32x64xf32>
    %155 = tpu.matmul %4, %154, %cst_66 {dimension_numbers = #tpu.dot_dimension_numbers<[1], [0], [0], [1], [0, 0, 1, 1], [], []>} : vector<32x32xf32>, vector<32x64xf32>, vector<32x64xf32> -> vector<32x64xf32>
    %156 = arith.subf %138, %155 : vector<32x64xf32>
    %c1 = arith.constant 1 : index
    %c0_67 = arith.constant 0 : index
    %c0_68 = arith.constant 0 : index
    %157 = vector.load %arg3[%c1, %c0_67, %c0_68] : memref<2x1x64xf32, #tpu.memory_space<vmem>>, vector<1x1x64xf32>
    %158 = vector.shape_cast %157 : vector<1x1x64xf32> to vector<1x64xf32>
    %c1_69 = arith.constant 1 : index
    %c0_70 = arith.constant 0 : index
    %c0_71 = arith.constant 0 : index
    %159 = vector.load %arg4[%c1_69, %c0_70, %c0_71] : memref<2x1x64xf32, #tpu.memory_space<vmem>>, vector<1x1x64xf32>
    %160 = vector.shape_cast %159 : vector<1x1x64xf32> to vector<1x64xf32>
    %cst_72 = arith.constant dense<0.000000e+00> : vector<32xf32>
    %161 = vector.multi_reduction <add>, %156, %cst_72 [1] : vector<32x64xf32> to vector<32xf32>
    %162 = vector.shape_cast %161 : vector<32xf32> to vector<32x1xf32>
    %cst_73 = arith.constant 6.400000e+01 : f32
    %163 = vector.broadcast %cst_73 : f32 to vector<32x1xf32>
    %164 = arith.divf %162, %163 : vector<32x1xf32>
    %165 = vector.broadcast %164 : vector<32x1xf32> to vector<32x64xf32>
    %166 = arith.subf %156, %165 : vector<32x64xf32>
    %167 = arith.mulf %166, %166 : vector<32x64xf32>
    %cst_74 = arith.constant dense<0.000000e+00> : vector<32xf32>
    %168 = vector.multi_reduction <add>, %167, %cst_74 [1] : vector<32x64xf32> to vector<32xf32>
    %169 = vector.shape_cast %168 : vector<32xf32> to vector<32x1xf32>
    %cst_75 = arith.constant 6.400000e+01 : f32
    %170 = vector.broadcast %cst_75 : f32 to vector<32x1xf32>
    %171 = arith.divf %169, %170 : vector<32x1xf32>
    %172 = vector.broadcast %164 : vector<32x1xf32> to vector<32x64xf32>
    %173 = arith.subf %156, %172 : vector<32x64xf32>
    %cst_76 = arith.constant 9.99999974E-6 : f32
    %174 = vector.broadcast %cst_76 : f32 to vector<32x1xf32>
    %175 = arith.addf %171, %174 : vector<32x1xf32>
    %176 = math.rsqrt %175 : vector<32x1xf32>
    %177 = vector.broadcast %176 : vector<32x1xf32> to vector<32x64xf32>
    %178 = arith.mulf %173, %177 : vector<32x64xf32>
    %179 = vector.broadcast %158 : vector<1x64xf32> to vector<32x64xf32>
    %180 = arith.mulf %178, %179 : vector<32x64xf32>
    %181 = vector.broadcast %160 : vector<1x64xf32> to vector<32x64xf32>
    %182 = arith.addf %180, %181 : vector<32x64xf32>
    %c1_77 = arith.constant 1 : index
    %c0_78 = arith.constant 0 : index
    %c0_79 = arith.constant 0 : index
    %183 = vector.load %arg5[%c1_77, %c0_78, %c0_79] : memref<2x64x96xf32, #tpu.memory_space<vmem>>, vector<1x64x96xf32>
    %184 = vector.shape_cast %183 : vector<1x64x96xf32> to vector<64x96xf32>
    %cst_80 = arith.constant dense<0.000000e+00> : vector<32x96xf32>
    %185 = tpu.matmul %182, %184, %cst_80 {dimension_numbers = #tpu.dot_dimension_numbers<[1], [0], [0], [1], [0, 0, 1, 1], [], []>} : vector<32x64xf32>, vector<64x96xf32>, vector<32x96xf32> -> vector<32x96xf32>
    %186 = vector.extract_strided_slice %185 {offsets = [0, 0], sizes = [16, 16], strides = [1, 1]} : vector<32x96xf32> to vector<16x16xf32>
    %187 = vector.extract_strided_slice %185 {offsets = [0, 32], sizes = [16, 16], strides = [1, 1]} : vector<32x96xf32> to vector<16x16xf32>
    %188 = vector.extract_strided_slice %185 {offsets = [0, 64], sizes = [16, 16], strides = [1, 1]} : vector<32x96xf32> to vector<16x16xf32>
    %cst_81 = arith.constant dense<0.000000e+00> : vector<16x16xf32>
    %189 = tpu.matmul %186, %187, %cst_81 {dimension_numbers = #tpu.dot_dimension_numbers<[1], [1], [0], [0], [0, 0, 1, 0], [], []>} : vector<16x16xf32>, vector<16x16xf32>, vector<16x16xf32> -> vector<16x16xf32>
    %cst_82 = arith.constant 2.500000e-01 : f32
    %190 = vector.broadcast %cst_82 : f32 to vector<16x16xf32>
    %191 = arith.mulf %189, %190 : vector<16x16xf32>
    %cst_83 = arith.constant dense<0xFF800000> : vector<16xf32>
    %192 = vector.multi_reduction <maximumf>, %191, %cst_83 [1] : vector<16x16xf32> to vector<16xf32>
    %193 = vector.shape_cast %192 : vector<16xf32> to vector<16x1xf32>
    %194 = vector.broadcast %193 : vector<16x1xf32> to vector<16x16xf32>
    %195 = arith.subf %191, %194 : vector<16x16xf32>
    %196 = math.exp %195 : vector<16x16xf32>
    %cst_84 = arith.constant dense<0.000000e+00> : vector<16xf32>
    %197 = vector.multi_reduction <add>, %196, %cst_84 [1] : vector<16x16xf32> to vector<16xf32>
    %198 = vector.shape_cast %197 : vector<16xf32> to vector<16x1xf32>
    %199 = tpu.reciprocal %198 {approx = true} : vector<16x1xf32> -> vector<16x1xf32>
    %200 = vector.broadcast %199 : vector<16x1xf32> to vector<16x16xf32>
    %201 = arith.mulf %196, %200 : vector<16x16xf32>
    %cst_85 = arith.constant dense<0.000000e+00> : vector<16x16xf32>
    %202 = tpu.matmul %201, %188, %cst_85 {dimension_numbers = #tpu.dot_dimension_numbers<[1], [0], [0], [1], [0, 0, 1, 1], [], []>} : vector<16x16xf32>, vector<16x16xf32>, vector<16x16xf32> -> vector<16x16xf32>
    %203 = vector.extract_strided_slice %185 {offsets = [0, 16], sizes = [16, 16], strides = [1, 1]} : vector<32x96xf32> to vector<16x16xf32>
    %204 = vector.extract_strided_slice %185 {offsets = [0, 48], sizes = [16, 16], strides = [1, 1]} : vector<32x96xf32> to vector<16x16xf32>
    %205 = vector.extract_strided_slice %185 {offsets = [0, 80], sizes = [16, 16], strides = [1, 1]} : vector<32x96xf32> to vector<16x16xf32>
    %cst_86 = arith.constant dense<0.000000e+00> : vector<16x16xf32>
    %206 = tpu.matmul %203, %204, %cst_86 {dimension_numbers = #tpu.dot_dimension_numbers<[1], [1], [0], [0], [0, 0, 1, 0], [], []>} : vector<16x16xf32>, vector<16x16xf32>, vector<16x16xf32> -> vector<16x16xf32>
    %cst_87 = arith.constant 2.500000e-01 : f32
    %207 = vector.broadcast %cst_87 : f32 to vector<16x16xf32>
    %208 = arith.mulf %206, %207 : vector<16x16xf32>
    %cst_88 = arith.constant dense<0xFF800000> : vector<16xf32>
    %209 = vector.multi_reduction <maximumf>, %208, %cst_88 [1] : vector<16x16xf32> to vector<16xf32>
    %210 = vector.shape_cast %209 : vector<16xf32> to vector<16x1xf32>
    %211 = vector.broadcast %210 : vector<16x1xf32> to vector<16x16xf32>
    %212 = arith.subf %208, %211 : vector<16x16xf32>
    %213 = math.exp %212 : vector<16x16xf32>
    %cst_89 = arith.constant dense<0.000000e+00> : vector<16xf32>
    %214 = vector.multi_reduction <add>, %213, %cst_89 [1] : vector<16x16xf32> to vector<16xf32>
    %215 = vector.shape_cast %214 : vector<16xf32> to vector<16x1xf32>
    %216 = tpu.reciprocal %215 {approx = true} : vector<16x1xf32> -> vector<16x1xf32>
    %217 = vector.broadcast %216 : vector<16x1xf32> to vector<16x16xf32>
    %218 = arith.mulf %213, %217 : vector<16x16xf32>
    %cst_90 = arith.constant dense<0.000000e+00> : vector<16x16xf32>
    %219 = tpu.matmul %218, %205, %cst_90 {dimension_numbers = #tpu.dot_dimension_numbers<[1], [0], [0], [1], [0, 0, 1, 1], [], []>} : vector<16x16xf32>, vector<16x16xf32>, vector<16x16xf32> -> vector<16x16xf32>
    %220 = tpu.concatenate %202, %219 in 1 : vector<16x16xf32>, vector<16x16xf32> -> vector<16x32xf32>
    %221 = vector.extract_strided_slice %185 {offsets = [16, 0], sizes = [16, 16], strides = [1, 1]} : vector<32x96xf32> to vector<16x16xf32>
    %222 = vector.extract_strided_slice %185 {offsets = [16, 32], sizes = [16, 16], strides = [1, 1]} : vector<32x96xf32> to vector<16x16xf32>
    %223 = vector.extract_strided_slice %185 {offsets = [16, 64], sizes = [16, 16], strides = [1, 1]} : vector<32x96xf32> to vector<16x16xf32>
    %cst_91 = arith.constant dense<0.000000e+00> : vector<16x16xf32>
    %224 = tpu.matmul %221, %222, %cst_91 {dimension_numbers = #tpu.dot_dimension_numbers<[1], [1], [0], [0], [0, 0, 1, 0], [], []>} : vector<16x16xf32>, vector<16x16xf32>, vector<16x16xf32> -> vector<16x16xf32>
    %cst_92 = arith.constant 2.500000e-01 : f32
    %225 = vector.broadcast %cst_92 : f32 to vector<16x16xf32>
    %226 = arith.mulf %224, %225 : vector<16x16xf32>
    %cst_93 = arith.constant dense<0xFF800000> : vector<16xf32>
    %227 = vector.multi_reduction <maximumf>, %226, %cst_93 [1] : vector<16x16xf32> to vector<16xf32>
    %228 = vector.shape_cast %227 : vector<16xf32> to vector<16x1xf32>
    %229 = vector.broadcast %228 : vector<16x1xf32> to vector<16x16xf32>
    %230 = arith.subf %226, %229 : vector<16x16xf32>
    %231 = math.exp %230 : vector<16x16xf32>
    %cst_94 = arith.constant dense<0.000000e+00> : vector<16xf32>
    %232 = vector.multi_reduction <add>, %231, %cst_94 [1] : vector<16x16xf32> to vector<16xf32>
    %233 = vector.shape_cast %232 : vector<16xf32> to vector<16x1xf32>
    %234 = tpu.reciprocal %233 {approx = true} : vector<16x1xf32> -> vector<16x1xf32>
    %235 = vector.broadcast %234 : vector<16x1xf32> to vector<16x16xf32>
    %236 = arith.mulf %231, %235 : vector<16x16xf32>
    %cst_95 = arith.constant dense<0.000000e+00> : vector<16x16xf32>
    %237 = tpu.matmul %236, %223, %cst_95 {dimension_numbers = #tpu.dot_dimension_numbers<[1], [0], [0], [1], [0, 0, 1, 1], [], []>} : vector<16x16xf32>, vector<16x16xf32>, vector<16x16xf32> -> vector<16x16xf32>
    %238 = vector.extract_strided_slice %185 {offsets = [16, 16], sizes = [16, 16], strides = [1, 1]} : vector<32x96xf32> to vector<16x16xf32>
    %239 = vector.extract_strided_slice %185 {offsets = [16, 48], sizes = [16, 16], strides = [1, 1]} : vector<32x96xf32> to vector<16x16xf32>
    %240 = vector.extract_strided_slice %185 {offsets = [16, 80], sizes = [16, 16], strides = [1, 1]} : vector<32x96xf32> to vector<16x16xf32>
    %cst_96 = arith.constant dense<0.000000e+00> : vector<16x16xf32>
    %241 = tpu.matmul %238, %239, %cst_96 {dimension_numbers = #tpu.dot_dimension_numbers<[1], [1], [0], [0], [0, 0, 1, 0], [], []>} : vector<16x16xf32>, vector<16x16xf32>, vector<16x16xf32> -> vector<16x16xf32>
    %cst_97 = arith.constant 2.500000e-01 : f32
    %242 = vector.broadcast %cst_97 : f32 to vector<16x16xf32>
    %243 = arith.mulf %241, %242 : vector<16x16xf32>
    %cst_98 = arith.constant dense<0xFF800000> : vector<16xf32>
    %244 = vector.multi_reduction <maximumf>, %243, %cst_98 [1] : vector<16x16xf32> to vector<16xf32>
    %245 = vector.shape_cast %244 : vector<16xf32> to vector<16x1xf32>
    %246 = vector.broadcast %245 : vector<16x1xf32> to vector<16x16xf32>
    %247 = arith.subf %243, %246 : vector<16x16xf32>
    %248 = math.exp %247 : vector<16x16xf32>
    %cst_99 = arith.constant dense<0.000000e+00> : vector<16xf32>
    %249 = vector.multi_reduction <add>, %248, %cst_99 [1] : vector<16x16xf32> to vector<16xf32>
    %250 = vector.shape_cast %249 : vector<16xf32> to vector<16x1xf32>
    %251 = tpu.reciprocal %250 {approx = true} : vector<16x1xf32> -> vector<16x1xf32>
    %252 = vector.broadcast %251 : vector<16x1xf32> to vector<16x16xf32>
    %253 = arith.mulf %248, %252 : vector<16x16xf32>
    %cst_100 = arith.constant dense<0.000000e+00> : vector<16x16xf32>
    %254 = tpu.matmul %253, %240, %cst_100 {dimension_numbers = #tpu.dot_dimension_numbers<[1], [0], [0], [1], [0, 0, 1, 1], [], []>} : vector<16x16xf32>, vector<16x16xf32>, vector<16x16xf32> -> vector<16x16xf32>
    %255 = tpu.concatenate %237, %254 in 1 : vector<16x16xf32>, vector<16x16xf32> -> vector<16x32xf32>
    %256 = tpu.concatenate %220, %255 in 0 : vector<16x32xf32>, vector<16x32xf32> -> vector<32x32xf32>
    %c1_101 = arith.constant 1 : index
    %c0_102 = arith.constant 0 : index
    %c0_103 = arith.constant 0 : index
    %257 = vector.load %arg6[%c1_101, %c0_102, %c0_103] : memref<2x32x64xf32, #tpu.memory_space<vmem>>, vector<1x32x64xf32>
    %258 = vector.shape_cast %257 : vector<1x32x64xf32> to vector<32x64xf32>
    %cst_104 = arith.constant dense<0.000000e+00> : vector<32x64xf32>
    %259 = tpu.matmul %256, %258, %cst_104 {dimension_numbers = #tpu.dot_dimension_numbers<[1], [0], [0], [1], [0, 0, 1, 1], [], []>} : vector<32x32xf32>, vector<32x64xf32>, vector<32x64xf32> -> vector<32x64xf32>
    %cst_105 = arith.constant 5.000000e-01 : f32
    %260 = vector.broadcast %cst_105 : f32 to vector<32x64xf32>
    %261 = arith.mulf %260, %259 : vector<32x64xf32>
    %262 = arith.addf %261, %156 : vector<32x64xf32>
    %cst_106 = arith.constant dense<0.000000e+00> : vector<32x64xf32>
    %263 = tpu.matmul %1, %262, %cst_106 {dimension_numbers = #tpu.dot_dimension_numbers<[1], [0], [0], [1], [0, 0, 1, 1], [], []>} : vector<32x32xf32>, vector<32x64xf32>, vector<32x64xf32> -> vector<32x64xf32>
    %cst_107 = arith.constant 1.000000e-10 : f32
    %264 = vector.broadcast %cst_107 : f32 to vector<32x64xf32>
    %265 = arith.mulf %264, %263 : vector<32x64xf32>
    %266 = arith.subf %262, %265 : vector<32x64xf32>
    %cst_108 = arith.constant 1.000000e+00 : f32
    %267 = vector.broadcast %cst_108 : f32 to vector<32x64xf32>
    %268 = arith.mulf %266, %267 : vector<32x64xf32>
    %cst_109 = arith.constant dense<0.000000e+00> : vector<32x64xf32>
    %269 = tpu.matmul %1, %268, %cst_109 {dimension_numbers = #tpu.dot_dimension_numbers<[1], [0], [0], [1], [0, 0, 1, 1], [], []>} : vector<32x32xf32>, vector<32x64xf32>, vector<32x64xf32> -> vector<32x64xf32>
    %270 = arith.subf %269, %268 : vector<32x64xf32>
    %271 = arith.mulf %270, %270 : vector<32x64xf32>
    %cst_110 = arith.constant dense<0.000000e+00> : vector<32xf32>
    %272 = vector.multi_reduction <add>, %271, %cst_110 [1] : vector<32x64xf32> to vector<32xf32>
    %273 = vector.shape_cast %272 : vector<32xf32> to vector<32x1xf32>
    %274 = math.sqrt %273 : vector<32x1xf32>
    %cst_111 = arith.constant 1.000000e-10 : f32
    %275 = vector.broadcast %cst_111 : f32 to vector<32x1xf32>
    %276 = arith.addf %274, %275 : vector<32x1xf32>
    %277 = vector.broadcast %276 : vector<32x1xf32> to vector<32x64xf32>
    %278 = arith.divf %270, %277 : vector<32x64xf32>
    %cst_112 = arith.constant dense<0.000000e+00> : vector<32x64xf32>
    %279 = tpu.matmul %4, %278, %cst_112 {dimension_numbers = #tpu.dot_dimension_numbers<[1], [0], [0], [1], [0, 0, 1, 1], [], []>} : vector<32x32xf32>, vector<32x64xf32>, vector<32x64xf32> -> vector<32x64xf32>
    %280 = arith.subf %262, %279 : vector<32x64xf32>
    %c1_113 = arith.constant 1 : index
    %c0_114 = arith.constant 0 : index
    %c0_115 = arith.constant 0 : index
    %281 = vector.load %arg7[%c1_113, %c0_114, %c0_115] : memref<2x64x64xf32, #tpu.memory_space<vmem>>, vector<1x64x64xf32>
    %282 = vector.shape_cast %281 : vector<1x64x64xf32> to vector<64x64xf32>
    %cst_116 = arith.constant dense<0.000000e+00> : vector<32x64xf32>
    %283 = tpu.matmul %280, %282, %cst_116 {dimension_numbers = #tpu.dot_dimension_numbers<[1], [0], [0], [1], [0, 0, 1, 1], [], []>} : vector<32x64xf32>, vector<64x64xf32>, vector<32x64xf32> -> vector<32x64xf32>
    %c1_117 = arith.constant 1 : index
    %c0_118 = arith.constant 0 : index
    %c0_119 = arith.constant 0 : index
    %284 = vector.load %arg8[%c1_117, %c0_118, %c0_119] : memref<2x1x64xf32, #tpu.memory_space<vmem>>, vector<1x1x64xf32>
    %285 = vector.shape_cast %284 : vector<1x1x64xf32> to vector<1x64xf32>
    %286 = vector.broadcast %285 : vector<1x64xf32> to vector<32x64xf32>
    %287 = arith.addf %283, %286 : vector<32x64xf32>
    %cst_120 = arith.constant 5.000000e-01 : f32
    %288 = vector.broadcast %cst_120 : f32 to vector<32x64xf32>
    %289 = arith.mulf %288, %287 : vector<32x64xf32>
    %290 = arith.addf %289, %280 : vector<32x64xf32>
    %cst_121 = arith.constant dense<0.000000e+00> : vector<32x64xf32>
    %291 = tpu.matmul %1, %290, %cst_121 {dimension_numbers = #tpu.dot_dimension_numbers<[1], [0], [0], [1], [0, 0, 1, 1], [], []>} : vector<32x32xf32>, vector<32x64xf32>, vector<32x64xf32> -> vector<32x64xf32>
    %cst_122 = arith.constant 1.000000e-10 : f32
    %292 = vector.broadcast %cst_122 : f32 to vector<32x64xf32>
    %293 = arith.mulf %292, %291 : vector<32x64xf32>
    %294 = arith.subf %290, %293 : vector<32x64xf32>
    %cst_123 = arith.constant 1.000000e+00 : f32
    %295 = vector.broadcast %cst_123 : f32 to vector<32x64xf32>
    %296 = arith.mulf %294, %295 : vector<32x64xf32>
    %cst_124 = arith.constant dense<0.000000e+00> : vector<32x64xf32>
    %297 = tpu.matmul %1, %296, %cst_124 {dimension_numbers = #tpu.dot_dimension_numbers<[1], [0], [0], [1], [0, 0, 1, 1], [], []>} : vector<32x32xf32>, vector<32x64xf32>, vector<32x64xf32> -> vector<32x64xf32>
    %298 = arith.subf %297, %296 : vector<32x64xf32>
    %299 = arith.mulf %298, %298 : vector<32x64xf32>
    %cst_125 = arith.constant dense<0.000000e+00> : vector<32xf32>
    %300 = vector.multi_reduction <add>, %299, %cst_125 [1] : vector<32x64xf32> to vector<32xf32>
    %301 = vector.shape_cast %300 : vector<32xf32> to vector<32x1xf32>
    %302 = math.sqrt %301 : vector<32x1xf32>
    %cst_126 = arith.constant 1.000000e-10 : f32
    %303 = vector.broadcast %cst_126 : f32 to vector<32x1xf32>
    %304 = arith.addf %302, %303 : vector<32x1xf32>
    %305 = vector.broadcast %304 : vector<32x1xf32> to vector<32x64xf32>
    %306 = arith.divf %298, %305 : vector<32x64xf32>
    %cst_127 = arith.constant dense<0.000000e+00> : vector<32x64xf32>
    %307 = tpu.matmul %4, %306, %cst_127 {dimension_numbers = #tpu.dot_dimension_numbers<[1], [0], [0], [1], [0, 0, 1, 1], [], []>} : vector<32x32xf32>, vector<32x64xf32>, vector<32x64xf32> -> vector<32x64xf32>
    %308 = arith.subf %290, %307 : vector<32x64xf32>
    %c0_128 = arith.constant 0 : index
    %c0_129 = arith.constant 0 : index
    %309 = vector.load %arg9[%c0_128, %c0_129] : memref<32x64xf32, #tpu.memory_space<vmem>>, vector<32x64xf32>
    tpu.vector_store %arg9[%c0_128, %c0_129], %308 {strides = array<i32>} : memref<32x64xf32, #tpu.memory_space<vmem>>, vector<32x64xf32>,
    return
  }
}

</mosaic_0001>

<llo_original>
// kernel: transformer_d.1
$region0: #{transformer_d.1}
  #allocation0 [shape = 'u32[]', space=smem, size = 0x4, offset = 0x4, fixed_abs, tag = 'smem constant byte address 0x4 - core index']
  #allocation1 [shape = 'u32[72,128]{1,0:T(1,128)}', space=vmem, size = 0x9000, scoped, tag = 'internal scratch']
  %s0 = inlined_call_operand.hbm [shape: f32[32,64], index: 0, kind: input, shape index: {}]
  %s1 = inlined_call_operand.vmem [shape: f32[32,32], index: 1, kind: input, shape index: {}]
  %s2 = inlined_call_operand.vmem [shape: f32[32,32], index: 2, kind: input, shape index: {}]
  %s3 = inlined_call_operand.vmem [shape: f32[2,1,64], index: 3, kind: input, shape index: {}]
  %s4 = inlined_call_operand.vmem [shape: f32[2,1,64], index: 4, kind: input, shape index: {}]
  %s5 = inlined_call_operand.vmem [shape: f32[2,64,96], index: 5, kind: input, shape index: {}]
  %s6 = inlined_call_operand.hbm [shape: f32[2,32,64], index: 6, kind: input, shape index: {}]
  %s7 = inlined_call_operand.vmem [shape: f32[2,64,64], index: 7, kind: input, shape index: {}]
  %s8 = inlined_call_operand.vmem [shape: f32[2,1,64], index: 8, kind: input, shape index: {}]
  %s9 = inlined_call_operand.hbm [shape: f32[32,64], index: 9, kind: output, shape index: {}]
  %s10 = sld [smem:[#allocation0]]
  $region54: #{transformer_d.1} parent=0
    _
  %s12 = ssub.s32 1, %s10
  %s13 = scalar_select 0, %s12, %s10
  $region1: #{transformer_d.1} parent=0
    #allocation2 [shape = 'u8[16384]{0}', space=vmem, size = 0x4000, scoped, tag = 'input window, operand 0, single buffered']
    #allocation3 [shape = 's32[1]{0}', space=sflag, size = 0x4, scoped, tag = 'scoped memory for transformer_d.1']
    #allocation4 [shape = 's32[1]{0}', space=sflag, size = 0x4, scoped, tag = 'scoped memory for transformer_d.1']
    #allocation5 [shape = 'u8[32768]{0}', space=vmem, size = 0x8000, scoped, tag = 'input window, operand 6, single buffered']
    #allocation6 [shape = 's32[1]{0}', space=sflag, size = 0x4, scoped, tag = 'scoped memory for transformer_d.1']
    #allocation7 [shape = 'u8[16384]{0}', space=vmem, size = 0x4000, scoped, tag = 'output window, operand 0, single buffered']
    %14 = vsyncpa [#allocation3], 0
    %15 = vsyncpa [#allocation6], 0
    %16 = vsyncpa [#allocation4], 0
    // Predicated region
    $region2: #{transformer_d.1} parent=1 // pred_check
      _
    $region3: #{transformer_d.1} parent=1 // pred_check_branch
      %18 = sbr.rel (0) target = $region5
    $region4: #{transformer_d.1} parent=1 // pred_region
      %20 = vsyncadd [#allocation3], 0
      %s21 = sshll.u32 %s0, 4
      %s22 = int_to_ptr.hbm [resolvable:$true] %s21
      %s23 = sshll.u32 [#allocation2], 4
      %s24 = int_to_ptr.vmem [resolvable:$true] %s23
      %29 = dma.hbm_to_vmem [thread:$0]  %s22, 512, %s24, [#allocation3], 128, 128, 8
    $region5: #{transformer_d.1} parent=1 // pred_fallthru
      _
    // Predicated region
    $region6: #{transformer_d.1} parent=1 // pred_check
      _
    $region7: #{transformer_d.1} parent=1 // pred_check_branch
      %31 = sbr.rel (0) target = $region9
    $region8: #{transformer_d.1} parent=1 // pred_region
      _
    $region9: #{transformer_d.1} parent=1 // pred_fallthru
      _
    // Predicated region
    $region10: #{transformer_d.1} parent=1 // pred_check
      _
    $region11: #{transformer_d.1} parent=1 // pred_check_branch
      %33 = sbr.rel (0) target = $region13
    $region12: #{transformer_d.1} parent=1 // pred_region
      _
    $region13: #{transformer_d.1} parent=1 // pred_fallthru
      _
    // Predicated region
    $region14: #{transformer_d.1} parent=1 // pred_check
      _
    $region15: #{transformer_d.1} parent=1 // pred_check_branch
      %35 = sbr.rel (0) target = $region17
    $region16: #{transformer_d.1} parent=1 // pred_region
      _
    $region17: #{transformer_d.1} parent=1 // pred_fallthru
      _
    // Predicated region
    $region18: #{transformer_d.1} parent=1 // pred_check
      _
    $region19: #{transformer_d.1} parent=1 // pred_check_branch
      %37 = sbr.rel (0) target = $region21
    $region20: #{transformer_d.1} parent=1 // pred_region
      _
    $region21: #{transformer_d.1} parent=1 // pred_fallthru
      _
    // Predicated region
    $region22: #{transformer_d.1} parent=1 // pred_check
      _
    $region23: #{transformer_d.1} parent=1 // pred_check_branch
      %39 = sbr.rel (0) target = $region25
    $region24: #{transformer_d.1} parent=1 // pred_region
      _
    $region25: #{transformer_d.1} parent=1 // pred_fallthru
      _
    // Predicated region
    $region26: #{transformer_d.1} parent=1 // pred_check
      _
    $region27: #{transformer_d.1} parent=1 // pred_check_branch
      %41 = sbr.rel (0) target = $region29
    $region28: #{transformer_d.1} parent=1 // pred_region
      %43 = vsyncadd [#allocation6], 0
      %s44 = sshll.u32 %s6, 4
      %s45 = int_to_ptr.hbm [resolvable:$true] %s44
      %s46 = sshll.u32 [#allocation5], 4
      %s47 = int_to_ptr.vmem [resolvable:$true] %s46
      %52 = dma.hbm_to_vmem [thread:$0]  %s45, 1024, %s47, [#allocation6], 128, 128, 8
    $region29: #{transformer_d.1} parent=1 // pred_fallthru
      _
    // Predicated region
    $region30: #{transformer_d.1} parent=1 // pred_check
      _
    $region31: #{transformer_d.1} parent=1 // pred_check_branch
      %54 = sbr.rel (0) target = $region33
    $region32: #{transformer_d.1} parent=1 // pred_region
      _
    $region33: #{transformer_d.1} parent=1 // pred_fallthru
      _
    // Predicated region
    $region34: #{transformer_d.1} parent=1 // pred_check
      _
    $region35: #{transformer_d.1} parent=1 // pred_check_branch
      %56 = sbr.rel (0) target = $region37
    $region36: #{transformer_d.1} parent=1 // pred_region
      _
    $region37: #{transformer_d.1} parent=1 // pred_fallthru
      _
    // Predicated region
    $region38: #{transformer_d.1} parent=1 // pred_check
      _
    $region39: #{transformer_d.1} parent=1 // pred_check_branch
      %58 = sbr.rel (0) target = $region41
    $region40: #{transformer_d.1} parent=1 // pred_region
      %60 = dma.done [#allocation3], 512
    $region41: #{transformer_d.1} parent=1 // pred_fallthru
      _
    // Predicated region
    $region42: #{transformer_d.1} parent=1 // pred_check
      _
    $region43: #{transformer_d.1} parent=1 // pred_check_branch
      %62 = sbr.rel (0) target = $region45
    $region44: #{transformer_d.1} parent=1 // pred_region
      %64 = dma.done [#allocation6], 1024
    $region45: #{transformer_d.1} parent=1 // pred_fallthru
      _
    %v65 = vld [vmem:[#allocation2] sm:$0xff]
    %v66 = vld [vmem:[#allocation2 + $0x8] sm:$0xff]
    %v67 = vld [vmem:[#allocation2 + $0x10] sm:$0xff]
    %v68 = vld [vmem:[#allocation2 + $0x18] sm:$0xff]
    %v69 = vld [vmem:[%s1] sm:$0xff]
    %v70 = vld [vmem:[%s1 + $0x8] sm:$0xff]
    %v71 = vld [vmem:[%s1 + $0x10] sm:$0xff]
    %v72 = vld [vmem:[%s1 + $0x18] sm:$0xff]
    %v73 = vld [vmem:[%s2] sm:$0xff]
    %v74 = vld [vmem:[%s2 + $0x8] sm:$0xff]
    %v75 = vld [vmem:[%s2 + $0x10] sm:$0xff]
    %v76 = vld [vmem:[%s2 + $0x18] sm:$0xff]
    %v77 = vmul.f32 %v73, 0.5
    %v78 = vmul.f32 %v74, 0.5
    %v79 = vmul.f32 %v75, 0.5
    %v80 = vmul.f32 %v76, 0.5
    %v81 = vld [vmem:[%s3] sm:$0x1]
    %v82 = vld [vmem:[%s4] sm:$0x1]
    %vm83 = vcmask 523264
    %v84 = vsel %vm83, %v65, 0.0
    %85 = vadd.xlane.f32.xlu0 %v84
    %v86 = vpop.xlane.xlu0 %85
    %v87 = vsel %vm83, %v66, 0.0
    %88 = vadd.xlane.f32.xlu0 %v87
    %v89 = vpop.xlane.xlu0 %88
    %v90 = vsel %vm83, %v67, 0.0
    %91 = vadd.xlane.f32.xlu0 %v90
    %v92 = vpop.xlane.xlu0 %91
    %v93 = vsel %vm83, %v68, 0.0
    %94 = vadd.xlane.f32.xlu0 %v93
    %v95 = vpop.xlane.xlu0 %94
    %v96 = vrcp.pop 64.0
    %v97 = vmul.f32 64.0, %v96
    %v98 = vsub.f32 1.0, %v97
    %v99 = vmul.f32 %v96, %v98
    %v100 = vadd.f32 %v96, %v99
    %vm101 = vweird.f32 %v96
    %v102 = vsel %vm101, %v96, %v100
    %v103 = vmul.f32 %v86, %v102
    %v104 = vmul.f32 %v89, %v102
    %v105 = vmul.f32 %v92, %v102
    %v106 = vmul.f32 %v95, %v102
    %v107 = vsub.f32 %v65, %v103
    %v108 = vsub.f32 %v66, %v104
    %v109 = vsub.f32 %v67, %v105
    %v110 = vsub.f32 %v68, %v106
    %v111 = vmul.f32 %v107, %v107
    %v112 = vmul.f32 %v108, %v108
    %v113 = vmul.f32 %v109, %v109
    %v114 = vmul.f32 %v110, %v110
    %v115 = vsel %vm83, %v111, 0.0
    %116 = vadd.xlane.f32.xlu0 %v115
    %v117 = vpop.xlane.xlu0 %116
    %v118 = vsel %vm83, %v112, 0.0
    %119 = vadd.xlane.f32.xlu0 %v118
    %v120 = vpop.xlane.xlu0 %119
    %v121 = vsel %vm83, %v113, 0.0
    %122 = vadd.xlane.f32.xlu0 %v121
    %v123 = vpop.xlane.xlu0 %122
    %v124 = vsel %vm83, %v114, 0.0
    %125 = vadd.xlane.f32.xlu0 %v124
    %v126 = vpop.xlane.xlu0 %125
    %v127 = vmul.f32 %v117, %v102
    %v128 = vmul.f32 %v120, %v102
    %v129 = vmul.f32 %v123, %v102
    %v130 = vmul.f32 %v126, %v102
    %v131 = vadd.f32 %v127, 1e-05
    %v132 = vadd.f32 %v128, 1e-05
    %v133 = vadd.f32 %v129, 1e-05
    %v134 = vadd.f32 %v130, 1e-05
    %v135 = vrsqrt.pop %v131
    %v136 = vmul.f32 %v135, %v131
    %v137 = vmul.f32 %v136, %v135
    %v138 = vmul.f32 0.5, %v137
    %v139 = vsub.f32 1.5, %v138
    %v140 = vmul.f32 %v135, %v139
    %vm141 = vweird.f32 %v131
    %vm142 = vweird.f32 %v135
    %vm143 = vmor %vm141, %vm142
    %v144 = vsel %vm143, %v135, %v140
    %v145 = vrsqrt.pop %v132
    %v146 = vmul.f32 %v145, %v132
    %v147 = vmul.f32 %v146, %v145
    %v148 = vmul.f32 0.5, %v147
    %v149 = vsub.f32 1.5, %v148
    %v150 = vmul.f32 %v145, %v149
    %vm151 = vweird.f32 %v132
    %vm152 = vweird.f32 %v145
    %vm153 = vmor %vm151, %vm152
    %v154 = vsel %vm153, %v145, %v150
    %v155 = vrsqrt.pop %v133
    %v156 = vmul.f32 %v155, %v133
    %v157 = vmul.f32 %v156, %v155
    %v158 = vmul.f32 0.5, %v157
    %v159 = vsub.f32 1.5, %v158
    %v160 = vmul.f32 %v155, %v159
    %vm161 = vweird.f32 %v133
    %vm162 = vweird.f32 %v155
    %vm163 = vmor %vm161, %vm162
    %v164 = vsel %vm163, %v155, %v160
    %v165 = vrsqrt.pop %v134
    %v166 = vmul.f32 %v165, %v134
    %v167 = vmul.f32 %v166, %v165
    %v168 = vmul.f32 0.5, %v167
    %v169 = vsub.f32 1.5, %v168
    %v170 = vmul.f32 %v165, %v169
    %vm171 = vweird.f32 %v134
    %vm172 = vweird.f32 %v165
    %vm173 = vmor %vm171, %vm172
    %v174 = vsel %vm173, %v165, %v170
    %v175 = vmul.f32 %v107, %v144
    %v176 = vmul.f32 %v108, %v154
    %v177 = vmul.f32 %v109, %v164
    %v178 = vmul.f32 %v110, %v174
    %v180 = vperm.slane %v81, 0
    %v182 = vmul.f32 %v175, %v180
    %v183 = vmul.f32 %v176, %v180
    %v184 = vmul.f32 %v177, %v180
    %v185 = vmul.f32 %v178, %v180
    %v187 = vperm.slane %v82, 0
    %v189 = vadd.f32 %v182, %v187
    %v190 = vadd.f32 %v183, %v187
    %v191 = vadd.f32 %v184, %v187
    %v192 = vadd.f32 %v185, %v187
    %v193 = vld [vmem:[%s5] sm:$0xff]
    %v194 = vld [vmem:[%s5 + $0x8] sm:$0xff]
    %v195 = vld [vmem:[%s5 + $0x10] sm:$0xff]
    %v196 = vld [vmem:[%s5 + $0x18] sm:$0xff]
    %v197 = vld [vmem:[%s5 + $0x20] sm:$0xff]
    %v198 = vld [vmem:[%s5 + $0x28] sm:$0xff]
    %v199 = vld [vmem:[%s5 + $0x30] sm:$0xff]
    %v200 = vld [vmem:[%s5 + $0x38] sm:$0xff]
    %v202 = vsel %vm83, %v189, 0
    %v205 = vsel %vm83, %v190, 0
    %v208 = vsel %vm83, %v191, 0
    %v211 = vsel %vm83, %v192, 0
    %213 = vmatpush.msra.mxu0 0.0
    %214 = vmatpush.msra.mxu0 0.0
    %215 = vmatpush.msra.mxu0 0.0
    %216 = vmatpush.msra.mxu0 0.0
    %217 = vmatpush.msra.mxu0 0.0
    %218 = vmatpush.msra.mxu0 0.0
    %219 = vmatpush.msra.mxu0 0.0
    %220 = vmatpush.msra.mxu0 0.0
    %221 = vmatpush.msra.mxu0 %v200
    %222 = vmatpush.msra.mxu0 %v199
    %223 = vmatpush.msra.mxu0 %v198
    %224 = vmatpush.msra.mxu0 %v197
    %225 = vmatpush.msra.mxu0 %v196
    %226 = vmatpush.msra.mxu0 %v195
    %227 = vmatpush.msra.mxu0 %v194
    %228 = vmatpush.msra.mxu0 %v193
    %229 = vmatmul.f32.gmra.mxu0 %v202
    %v230 = vpop.f32.mrf.mxu0
    %v231 = vadd.f32 0.0, %v230
    %232 = vmatmul.f32.gmra.mxu0 %v205
    %v233 = vpop.f32.mrf.mxu0
    %v234 = vadd.f32 0.0, %v233
    %235 = vmatmul.f32.gmra.mxu0 %v208
    %v236 = vpop.f32.mrf.mxu0
    %v237 = vadd.f32 0.0, %v236
    %238 = vmatmul.f32.gmra.mxu0 %v211
    %v239 = vpop.f32.mrf.mxu0
    %v240 = vadd.f32 0.0, %v239
    %241 = vdwg.mxu0
    %244 = vrot.lane.b32.xlu0 %v231, 96
    %v245 = vpop.permute.xlu0 %244
    %246 = vrot.lane.b32.xlu0 %v234, 96
    %v247 = vpop.permute.xlu0 %246
    %vm248 = vcmask 130048
    %v249 = vsel %vm248, %v231, 0
    %v251 = vsel %vm248, %v234, 0
    %v253 = vsel %vm248, %v245, 0
    %v255 = vsel %vm248, %v247, 0
    %257 = vmatpush.xpose.msra.mxu0 0.0
    %258 = vmatpush.xpose.msra.mxu0 0.0
    %259 = vmatpush.xpose.msra.mxu0 0.0
    %260 = vmatpush.xpose.msra.mxu0 0.0
    %261 = vmatpush.xpose.msra.mxu0 0.0
    %262 = vmatpush.xpose.msra.mxu0 0.0
    %263 = vmatpush.xpose.msra.mxu0 0.0
    %264 = vmatpush.xpose.msra.mxu0 0.0
    %265 = vmatpush.xpose.msra.mxu0 0.0
    %266 = vmatpush.xpose.msra.mxu0 0.0
    %267 = vmatpush.xpose.msra.mxu0 0.0
    %268 = vmatpush.xpose.msra.mxu0 0.0
    %269 = vmatpush.xpose.msra.mxu0 0.0
    %270 = vmatpush.xpose.msra.mxu0 0.0
    %271 = vmatpush.xpose.msra.mxu0 %v255
    %272 = vmatpush.xpose.msra.mxu0 %v253
    %273 = vmatmul.f32.gmra.mxu0 %v249
    %v274 = vpop.f32.mrf.mxu0
    %v275 = vadd.f32 0.0, %v274
    %276 = vmatmul.f32.gmra.mxu0 %v251
    %v277 = vpop.f32.mrf.mxu0
    %v278 = vadd.f32 0.0, %v277
    %279 = vdwg.mxu0
    %v280 = vmul.f32 %v275, 0.25
    %v281 = vmul.f32 %v278, 0.25
    %v282 = vsel %vm248, %v280, -inf
    %283 = vmax.xlane.f32.xlu0 %v282
    %v284 = vpop.xlane.xlu0 %283
    %v285 = vsel %vm248, %v281, -inf
    %286 = vmax.xlane.f32.xlu0 %v285
    %v287 = vpop.xlane.xlu0 %286
    %v288 = vsub.f32 %v280, %v284
    %v289 = vsub.f32 %v281, %v287
    %v290 = vmul.f32 %v288, 1.442695
    %v291 = vpow.pop %v290
    %v292 = vmul.f32 %v289, 1.442695
    %v293 = vpow.pop %v292
    %v294 = vsel %vm248, %v291, 0.0
    %295 = vadd.xlane.f32.xlu0 %v294
    %v296 = vpop.xlane.xlu0 %295
    %v297 = vsel %vm248, %v293, 0.0
    %298 = vadd.xlane.f32.xlu0 %v297
    %v299 = vpop.xlane.xlu0 %298
    %v300 = vrcp.pop %v296
    %v301 = vrcp.pop %v299
    %v302 = vmul.f32 %v291, %v300
    %v303 = vmul.f32 %v293, %v301
    %304 = vrot.lane.b32.xlu0 %v231, 64
    %v305 = vpop.permute.xlu0 %304
    %306 = vrot.lane.b32.xlu0 %v234, 64
    %v307 = vpop.permute.xlu0 %306
    %v311 = vsel %vm248, %v302, 0
    %v314 = vsel %vm248, %v303, 0
    %316 = vmatpush.msra.mxu0 0.0
    %317 = vmatpush.msra.mxu0 0.0
    %318 = vmatpush.msra.mxu0 0.0
    %319 = vmatpush.msra.mxu0 0.0
    %320 = vmatpush.msra.mxu0 0.0
    %321 = vmatpush.msra.mxu0 0.0
    %322 = vmatpush.msra.mxu0 0.0
    %323 = vmatpush.msra.mxu0 0.0
    %324 = vmatpush.msra.mxu0 0.0
    %325 = vmatpush.msra.mxu0 0.0
    %326 = vmatpush.msra.mxu0 0.0
    %327 = vmatpush.msra.mxu0 0.0
    %328 = vmatpush.msra.mxu0 0.0
    %329 = vmatpush.msra.mxu0 0.0
    %330 = vmatpush.msra.mxu0 %v307
    %331 = vmatpush.msra.mxu0 %v305
    %332 = vmatmul.f32.gmra.mxu0 %v311
    %v333 = vpop.f32.mrf.mxu0
    %v334 = vadd.f32 0.0, %v333
    %335 = vmatmul.f32.gmra.mxu0 %v314
    %v336 = vpop.f32.mrf.mxu0
    %v337 = vadd.f32 0.0, %v336
    %338 = vdwg.mxu0
    %339 = vrot.lane.b32.xlu0 %v231, 112
    %v340 = vpop.permute.xlu0 %339
    %341 = vrot.lane.b32.xlu0 %v234, 112
    %v342 = vpop.permute.xlu0 %341
    %343 = vrot.lane.b32.xlu0 %v231, 80
    %v344 = vpop.permute.xlu0 %343
    %345 = vrot.lane.b32.xlu0 %v234, 80
    %v346 = vpop.permute.xlu0 %345
    %v347 = vsel %vm248, %v340, 0
    %v349 = vsel %vm248, %v342, 0
    %v351 = vsel %vm248, %v344, 0
    %v353 = vsel %vm248, %v346, 0
    %355 = vmatpush.xpose.msra.mxu0 0.0
    %356 = vmatpush.xpose.msra.mxu0 0.0
    %357 = vmatpush.xpose.msra.mxu0 0.0
    %358 = vmatpush.xpose.msra.mxu0 0.0
    %359 = vmatpush.xpose.msra.mxu0 0.0
    %360 = vmatpush.xpose.msra.mxu0 0.0
    %361 = vmatpush.xpose.msra.mxu0 0.0
    %362 = vmatpush.xpose.msra.mxu0 0.0
    %363 = vmatpush.xpose.msra.mxu0 0.0
    %364 = vmatpush.xpose.msra.mxu0 0.0
    %365 = vmatpush.xpose.msra.mxu0 0.0
    %366 = vmatpush.xpose.msra.mxu0 0.0
    %367 = vmatpush.xpose.msra.mxu0 0.0
    %368 = vmatpush.xpose.msra.mxu0 0.0
    %369 = vmatpush.xpose.msra.mxu0 %v353
    %370 = vmatpush.xpose.msra.mxu0 %v351
    %371 = vmatmul.f32.gmra.mxu0 %v347
    %v372 = vpop.f32.mrf.mxu0
    %v373 = vadd.f32 0.0, %v372
    %374 = vmatmul.f32.gmra.mxu0 %v349
    %v375 = vpop.f32.mrf.mxu0
    %v376 = vadd.f32 0.0, %v375
    %377 = vdwg.mxu0
    %v378 = vmul.f32 %v373, 0.25
    %v379 = vmul.f32 %v376, 0.25
    %v380 = vsel %vm248, %v378, -inf
    %381 = vmax.xlane.f32.xlu0 %v380
    %v382 = vpop.xlane.xlu0 %381
    %v383 = vsel %vm248, %v379, -inf
    %384 = vmax.xlane.f32.xlu0 %v383
    %v385 = vpop.xlane.xlu0 %384
    %v386 = vsub.f32 %v378, %v382
    %v387 = vsub.f32 %v379, %v385
    %v388 = vmul.f32 %v386, 1.442695
    %v389 = vpow.pop %v388
    %v390 = vmul.f32 %v387, 1.442695
    %v391 = vpow.pop %v390
    %v392 = vsel %vm248, %v389, 0.0
    %393 = vadd.xlane.f32.xlu0 %v392
    %v394 = vpop.xlane.xlu0 %393
    %v395 = vsel %vm248, %v391, 0.0
    %396 = vadd.xlane.f32.xlu0 %v395
    %v397 = vpop.xlane.xlu0 %396
    %v398 = vrcp.pop %v394
    %v399 = vrcp.pop %v397
    %v400 = vmul.f32 %v389, %v398
    %v401 = vmul.f32 %v391, %v399
    %402 = vrot.lane.b32.xlu0 %v231, 48
    %v403 = vpop.permute.xlu0 %402
    %404 = vrot.lane.b32.xlu0 %v234, 48
    %v405 = vpop.permute.xlu0 %404
    %v409 = vsel %vm248, %v400, 0
    %v412 = vsel %vm248, %v401, 0
    %414 = vmatpush.msra.mxu0 0.0
    %415 = vmatpush.msra.mxu0 0.0
    %416 = vmatpush.msra.mxu0 0.0
    %417 = vmatpush.msra.mxu0 0.0
    %418 = vmatpush.msra.mxu0 0.0
    %419 = vmatpush.msra.mxu0 0.0
    %420 = vmatpush.msra.mxu0 0.0
    %421 = vmatpush.msra.mxu0 0.0
    %422 = vmatpush.msra.mxu0 0.0
    %423 = vmatpush.msra.mxu0 0.0
    %424 = vmatpush.msra.mxu0 0.0
    %425 = vmatpush.msra.mxu0 0.0
    %426 = vmatpush.msra.mxu0 0.0
    %427 = vmatpush.msra.mxu0 0.0
    %428 = vmatpush.msra.mxu0 %v405
    %429 = vmatpush.msra.mxu0 %v403
    %430 = vmatmul.f32.gmra.mxu0 %v409
    %v431 = vpop.f32.mrf.mxu0
    %v432 = vadd.f32 0.0, %v431
    %433 = vmatmul.f32.gmra.mxu0 %v412
    %v434 = vpop.f32.mrf.mxu0
    %v435 = vadd.f32 0.0, %v434
    %436 = vdwg.mxu0
    %439 = vrot.lane.b32.xlu0 %v432, 16
    %v440 = vpop.permute.xlu0 %439
    %441 = vrot.lane.b32.xlu0 %v435, 16
    %v442 = vpop.permute.xlu0 %441
    %v445 = vsel %vm248, %v334, %v440
    %v446 = vsel %vm248, %v337, %v442
    %449 = vrot.lane.b32.xlu0 %v237, 96
    %v450 = vpop.permute.xlu0 %449
    %451 = vrot.lane.b32.xlu0 %v240, 96
    %v452 = vpop.permute.xlu0 %451
    %v453 = vsel %vm248, %v237, 0
    %v455 = vsel %vm248, %v240, 0
    %v457 = vsel %vm248, %v450, 0
    %v459 = vsel %vm248, %v452, 0
    %461 = vmatpush.xpose.msra.mxu0 0.0
    %462 = vmatpush.xpose.msra.mxu0 0.0
    %463 = vmatpush.xpose.msra.mxu0 0.0
    %464 = vmatpush.xpose.msra.mxu0 0.0
    %465 = vmatpush.xpose.msra.mxu0 0.0
    %466 = vmatpush.xpose.msra.mxu0 0.0
    %467 = vmatpush.xpose.msra.mxu0 0.0
    %468 = vmatpush.xpose.msra.mxu0 0.0
    %469 = vmatpush.xpose.msra.mxu0 0.0
    %470 = vmatpush.xpose.msra.mxu0 0.0
    %471 = vmatpush.xpose.msra.mxu0 0.0
    %472 = vmatpush.xpose.msra.mxu0 0.0
    %473 = vmatpush.xpose.msra.mxu0 0.0
    %474 = vmatpush.xpose.msra.mxu0 0.0
    %475 = vmatpush.xpose.msra.mxu0 %v459
    %476 = vmatpush.xpose.msra.mxu0 %v457
    %477 = vmatmul.f32.gmra.mxu0 %v453
    %v478 = vpop.f32.mrf.mxu0
    %v479 = vadd.f32 0.0, %v478
    %480 = vmatmul.f32.gmra.mxu0 %v455
    %v481 = vpop.f32.mrf.mxu0
    %v482 = vadd.f32 0.0, %v481
    %483 = vdwg.mxu0
    %v484 = vmul.f32 %v479, 0.25
    %v485 = vmul.f32 %v482, 0.25
    %v486 = vsel %vm248, %v484, -inf
    %487 = vmax.xlane.f32.xlu0 %v486
    %v488 = vpop.xlane.xlu0 %487
    %v489 = vsel %vm248, %v485, -inf
    %490 = vmax.xlane.f32.xlu0 %v489
    %v491 = vpop.xlane.xlu0 %490
    %v492 = vsub.f32 %v484, %v488
    %v493 = vsub.f32 %v485, %v491
    %v494 = vmul.f32 %v492, 1.442695
    %v495 = vpow.pop %v494
    %v496 = vmul.f32 %v493, 1.442695
    %v497 = vpow.pop %v496
    %v498 = vsel %vm248, %v495, 0.0
    %499 = vadd.xlane.f32.xlu0 %v498
    %v500 = vpop.xlane.xlu0 %499
    %v501 = vsel %vm248, %v497, 0.0
    %502 = vadd.xlane.f32.xlu0 %v501
    %v503 = vpop.xlane.xlu0 %502
    %v504 = vrcp.pop %v500
    %v505 = vrcp.pop %v503
    %v506 = vmul.f32 %v495, %v504
    %v507 = vmul.f32 %v497, %v505
    %508 = vrot.lane.b32.xlu0 %v237, 64
    %v509 = vpop.permute.xlu0 %508
    %510 = vrot.lane.b32.xlu0 %v240, 64
    %v511 = vpop.permute.xlu0 %510
    %v515 = vsel %vm248, %v506, 0
    %v518 = vsel %vm248, %v507, 0
    %520 = vmatpush.msra.mxu0 0.0
    %521 = vmatpush.msra.mxu0 0.0
    %522 = vmatpush.msra.mxu0 0.0
    %523 = vmatpush.msra.mxu0 0.0
    %524 = vmatpush.msra.mxu0 0.0
    %525 = vmatpush.msra.mxu0 0.0
    %526 = vmatpush.msra.mxu0 0.0
    %527 = vmatpush.msra.mxu0 0.0
    %528 = vmatpush.msra.mxu0 0.0
    %529 = vmatpush.msra.mxu0 0.0
    %530 = vmatpush.msra.mxu0 0.0
    %531 = vmatpush.msra.mxu0 0.0
    %532 = vmatpush.msra.mxu0 0.0
    %533 = vmatpush.msra.mxu0 0.0
    %534 = vmatpush.msra.mxu0 %v511
    %535 = vmatpush.msra.mxu0 %v509
    %536 = vmatmul.f32.gmra.mxu0 %v515
    %v537 = vpop.f32.mrf.mxu0
    %v538 = vadd.f32 0.0, %v537
    %539 = vmatmul.f32.gmra.mxu0 %v518
    %v540 = vpop.f32.mrf.mxu0
    %v541 = vadd.f32 0.0, %v540
    %542 = vdwg.mxu0
    %543 = vrot.lane.b32.xlu0 %v237, 112
    %v544 = vpop.permute.xlu0 %543
    %545 = vrot.lane.b32.xlu0 %v240, 112
    %v546 = vpop.permute.xlu0 %545
    %547 = vrot.lane.b32.xlu0 %v237, 80
    %v548 = vpop.permute.xlu0 %547
    %549 = vrot.lane.b32.xlu0 %v240, 80
    %v550 = vpop.permute.xlu0 %549
    %v551 = vsel %vm248, %v544, 0
    %v553 = vsel %vm248, %v546, 0
    %v555 = vsel %vm248, %v548, 0
    %v557 = vsel %vm248, %v550, 0
    %559 = vmatpush.xpose.msra.mxu0 0.0
    %560 = vmatpush.xpose.msra.mxu0 0.0
    %561 = vmatpush.xpose.msra.mxu0 0.0
    %562 = vmatpush.xpose.msra.mxu0 0.0
    %563 = vmatpush.xpose.msra.mxu0 0.0
    %564 = vmatpush.xpose.msra.mxu0 0.0
    %565 = vmatpush.xpose.msra.mxu0 0.0
    %566 = vmatpush.xpose.msra.mxu0 0.0
    %567 = vmatpush.xpose.msra.mxu0 0.0
    %568 = vmatpush.xpose.msra.mxu0 0.0
    %569 = vmatpush.xpose.msra.mxu0 0.0
    %570 = vmatpush.xpose.msra.mxu0 0.0
    %571 = vmatpush.xpose.msra.mxu0 0.0
    %572 = vmatpush.xpose.msra.mxu0 0.0
    %573 = vmatpush.xpose.msra.mxu0 %v557
    %574 = vmatpush.xpose.msra.mxu0 %v555
    %575 = vmatmul.f32.gmra.mxu0 %v551
    %v576 = vpop.f32.mrf.mxu0
    %v577 = vadd.f32 0.0, %v576
    %578 = vmatmul.f32.gmra.mxu0 %v553
    %v579 = vpop.f32.mrf.mxu0
    %v580 = vadd.f32 0.0, %v579
    %581 = vdwg.mxu0
    %v582 = vmul.f32 %v577, 0.25
    %v583 = vmul.f32 %v580, 0.25
    %v584 = vsel %vm248, %v582, -inf
    %585 = vmax.xlane.f32.xlu0 %v584
    %v586 = vpop.xlane.xlu0 %585
    %v587 = vsel %vm248, %v583, -inf
    %588 = vmax.xlane.f32.xlu0 %v587
    %v589 = vpop.xlane.xlu0 %588
    %v590 = vsub.f32 %v582, %v586
    %v591 = vsub.f32 %v583, %v589
    %v592 = vmul.f32 %v590, 1.442695
    %v593 = vpow.pop %v592
    %v594 = vmul.f32 %v591, 1.442695
    %v595 = vpow.pop %v594
    %v596 = vsel %vm248, %v593, 0.0
    %597 = vadd.xlane.f32.xlu0 %v596
    %v598 = vpop.xlane.xlu0 %597
    %v599 = vsel %vm248, %v595, 0.0
    %600 = vadd.xlane.f32.xlu0 %v599
    %v601 = vpop.xlane.xlu0 %600
    %v602 = vrcp.pop %v598
    %v603 = vrcp.pop %v601
    %v604 = vmul.f32 %v593, %v602
    %v605 = vmul.f32 %v595, %v603
    %606 = vrot.lane.b32.xlu0 %v237, 48
    %v607 = vpop.permute.xlu0 %606
    %608 = vrot.lane.b32.xlu0 %v240, 48
    %v609 = vpop.permute.xlu0 %608
    %v613 = vsel %vm248, %v604, 0
    %v616 = vsel %vm248, %v605, 0
    %618 = vmatpush.msra.mxu0 0.0
    %619 = vmatpush.msra.mxu0 0.0
    %620 = vmatpush.msra.mxu0 0.0
    %621 = vmatpush.msra.mxu0 0.0
    %622 = vmatpush.msra.mxu0 0.0
    %623 = vmatpush.msra.mxu0 0.0
    %624 = vmatpush.msra.mxu0 0.0
    %625 = vmatpush.msra.mxu0 0.0
    %626 = vmatpush.msra.mxu0 0.0
    %627 = vmatpush.msra.mxu0 0.0
    %628 = vmatpush.msra.mxu0 0.0
    %629 = vmatpush.msra.mxu0 0.0
    %630 = vmatpush.msra.mxu0 0.0
    %631 = vmatpush.msra.mxu0 0.0
    %632 = vmatpush.msra.mxu0 %v609
    %633 = vmatpush.msra.mxu0 %v607
    %634 = vmatmul.f32.gmra.mxu0 %v613
    %v635 = vpop.f32.mrf.mxu0
    %v636 = vadd.f32 0.0, %v635
    %637 = vmatmul.f32.gmra.mxu0 %v616
    %v638 = vpop.f32.mrf.mxu0
    %v639 = vadd.f32 0.0, %v638
    %640 = vdwg.mxu0
    %643 = vrot.lane.b32.xlu0 %v636, 16
    %v644 = vpop.permute.xlu0 %643
    %645 = vrot.lane.b32.xlu0 %v639, 16
    %v646 = vpop.permute.xlu0 %645
    %v649 = vsel %vm248, %v538, %v644
    %v650 = vsel %vm248, %v541, %v646
    %v651 = vld [vmem:[#allocation5] sm:$0xff]
    %v652 = vld [vmem:[#allocation5 + $0x8] sm:$0xff]
    %v653 = vld [vmem:[#allocation5 + $0x10] sm:$0xff]
    %v654 = vld [vmem:[#allocation5 + $0x18] sm:$0xff]
    %vm655 = vcmask 261120
    %v657 = vsel %vm655, %v445, 0
    %v660 = vsel %vm655, %v446, 0
    %v663 = vsel %vm655, %v649, 0
    %v666 = vsel %vm655, %v650, 0
    %668 = vmatpush.msra.mxu0 0.0
    %669 = vmatpush.msra.mxu0 0.0
    %670 = vmatpush.msra.mxu0 0.0
    %671 = vmatpush.msra.mxu0 0.0
    %672 = vmatpush.msra.mxu0 0.0
    %673 = vmatpush.msra.mxu0 0.0
    %674 = vmatpush.msra.mxu0 0.0
    %675 = vmatpush.msra.mxu0 0.0
    %676 = vmatpush.msra.mxu0 0.0
    %677 = vmatpush.msra.mxu0 0.0
    %678 = vmatpush.msra.mxu0 0.0
    %679 = vmatpush.msra.mxu0 0.0
    %680 = vmatpush.msra.mxu0 %v654
    %681 = vmatpush.msra.mxu0 %v653
    %682 = vmatpush.msra.mxu0 %v652
    %683 = vmatpush.msra.mxu0 %v651
    %684 = vmatmul.f32.gmra.mxu0 %v657
    %v685 = vpop.f32.mrf.mxu0
    %v686 = vadd.f32 0.0, %v685
    %687 = vmatmul.f32.gmra.mxu0 %v660
    %v688 = vpop.f32.mrf.mxu0
    %v689 = vadd.f32 0.0, %v688
    %690 = vmatmul.f32.gmra.mxu0 %v663
    %v691 = vpop.f32.mrf.mxu0
    %v692 = vadd.f32 0.0, %v691
    %693 = vmatmul.f32.gmra.mxu0 %v666
    %v694 = vpop.f32.mrf.mxu0
    %v695 = vadd.f32 0.0, %v694
    %696 = vdwg.mxu0
    %v697 = vmul.f32 %v686, 0.5
    %v698 = vmul.f32 %v689, 0.5
    %v699 = vmul.f32 %v692, 0.5
    %v700 = vmul.f32 %v695, 0.5
    %v701 = vadd.f32 %v697, %v65
    %v702 = vadd.f32 %v698, %v66
    %v703 = vadd.f32 %v699, %v67
    %v704 = vadd.f32 %v700, %v68
    %v706 = vsel %vm655, %v69, 0
    %v709 = vsel %vm655, %v70, 0
    %v712 = vsel %vm655, %v71, 0
    %v715 = vsel %vm655, %v72, 0
    %717 = vmatpush.msra.mxu0 0.0
    %718 = vmatpush.msra.mxu0 0.0
    %719 = vmatpush.msra.mxu0 0.0
    %720 = vmatpush.msra.mxu0 0.0
    %721 = vmatpush.msra.mxu0 0.0
    %722 = vmatpush.msra.mxu0 0.0
    %723 = vmatpush.msra.mxu0 0.0
    %724 = vmatpush.msra.mxu0 0.0
    %725 = vmatpush.msra.mxu0 0.0
    %726 = vmatpush.msra.mxu0 0.0
    %727 = vmatpush.msra.mxu0 0.0
    %728 = vmatpush.msra.mxu0 0.0
    %729 = vmatpush.msra.mxu0 %v704
    %730 = vmatpush.msra.mxu0 %v703
    %731 = vmatpush.msra.mxu0 %v702
    %732 = vmatpush.msra.mxu0 %v701
    %733 = vmatmul.f32.gmra.mxu0 %v706
    %v734 = vpop.f32.mrf.mxu0
    %v735 = vadd.f32 0.0, %v734
    %736 = vmatmul.f32.gmra.mxu0 %v709
    %v737 = vpop.f32.mrf.mxu0
    %v738 = vadd.f32 0.0, %v737
    %739 = vmatmul.f32.gmra.mxu0 %v712
    %v740 = vpop.f32.mrf.mxu0
    %v741 = vadd.f32 0.0, %v740
    %742 = vmatmul.f32.gmra.mxu0 %v715
    %v743 = vpop.f32.mrf.mxu0
    %v744 = vadd.f32 0.0, %v743
    %745 = vdwg.mxu0
    %v746 = vmul.f32 %v735, 1e-10
    %v747 = vmul.f32 %v738, 1e-10
    %v748 = vmul.f32 %v741, 1e-10
    %v749 = vmul.f32 %v744, 1e-10
    %v750 = vsub.f32 %v701, %v746
    %v751 = vsub.f32 %v702, %v747
    %v752 = vsub.f32 %v703, %v748
    %v753 = vsub.f32 %v704, %v749
    %754 = vmatpush.msra.mxu0 0.0
    %755 = vmatpush.msra.mxu0 0.0
    %756 = vmatpush.msra.mxu0 0.0
    %757 = vmatpush.msra.mxu0 0.0
    %758 = vmatpush.msra.mxu0 0.0
    %759 = vmatpush.msra.mxu0 0.0
    %760 = vmatpush.msra.mxu0 0.0
    %761 = vmatpush.msra.mxu0 0.0
    %762 = vmatpush.msra.mxu0 0.0
    %763 = vmatpush.msra.mxu0 0.0
    %764 = vmatpush.msra.mxu0 0.0
    %765 = vmatpush.msra.mxu0 0.0
    %766 = vmatpush.msra.mxu0 %v753
    %767 = vmatpush.msra.mxu0 %v752
    %768 = vmatpush.msra.mxu0 %v751
    %769 = vmatpush.msra.mxu0 %v750
    %770 = vmatmul.f32.gmra.mxu0 %v706
    %v771 = vpop.f32.mrf.mxu0
    %v772 = vadd.f32 0.0, %v771
    %773 = vmatmul.f32.gmra.mxu0 %v709
    %v774 = vpop.f32.mrf.mxu0
    %v775 = vadd.f32 0.0, %v774
    %776 = vmatmul.f32.gmra.mxu0 %v712
    %v777 = vpop.f32.mrf.mxu0
    %v778 = vadd.f32 0.0, %v777
    %779 = vmatmul.f32.gmra.mxu0 %v715
    %v780 = vpop.f32.mrf.mxu0
    %v781 = vadd.f32 0.0, %v780
    %782 = vdwg.mxu0
    %v783 = vsub.f32 %v772, %v750
    %v784 = vsub.f32 %v775, %v751
    %v785 = vsub.f32 %v778, %v752
    %v786 = vsub.f32 %v781, %v753
    %v787 = vmul.f32 %v783, %v783
    %v788 = vmul.f32 %v784, %v784
    %v789 = vmul.f32 %v785, %v785
    %v790 = vmul.f32 %v786, %v786
    %v791 = vsel %vm83, %v787, 0.0
    %792 = vadd.xlane.f32.xlu0 %v791
    %v793 = vpop.xlane.xlu0 %792
    %v794 = vsel %vm83, %v788, 0.0
    %795 = vadd.xlane.f32.xlu0 %v794
    %v796 = vpop.xlane.xlu0 %795
    %v797 = vsel %vm83, %v789, 0.0
    %798 = vadd.xlane.f32.xlu0 %v797
    %v799 = vpop.xlane.xlu0 %798
    %v800 = vsel %vm83, %v790, 0.0
    %801 = vadd.xlane.f32.xlu0 %v800
    %v802 = vpop.xlane.xlu0 %801
    %v803 = vrsqrt.pop %v793
    %v804 = vmul.f32 %v803, %v793
    %v805 = vmul.f32 %v804, %v803
    %v806 = vmul.f32 0.5, %v805
    %v807 = vsub.f32 1.5, %v806
    %v808 = vmul.f32 %v803, %v807
    %v809 = vmul.f32 %v793, %v808
    %vm810 = vcmp.eq.f32.partialorder %v793, inf
    %v811 = vsel %vm810, %v793, %v809
    %vm812 = vcmp.eq.f32.partialorder %v793, 0.0
    %v813 = vand.u32 %v793, 2147483648
    %v814 = vsel %vm812, %v813, %v811
    %v815 = vrsqrt.pop %v796
    %v816 = vmul.f32 %v815, %v796
    %v817 = vmul.f32 %v816, %v815
    %v818 = vmul.f32 0.5, %v817
    %v819 = vsub.f32 1.5, %v818
    %v820 = vmul.f32 %v815, %v819
    %v821 = vmul.f32 %v796, %v820
    %vm822 = vcmp.eq.f32.partialorder %v796, inf
    %v823 = vsel %vm822, %v796, %v821
    %vm824 = vcmp.eq.f32.partialorder %v796, 0.0
    %v825 = vand.u32 %v796, 2147483648
    %v826 = vsel %vm824, %v825, %v823
    %v827 = vrsqrt.pop %v799
    %v828 = vmul.f32 %v827, %v799
    %v829 = vmul.f32 %v828, %v827
    %v830 = vmul.f32 0.5, %v829
    %v831 = vsub.f32 1.5, %v830
    %v832 = vmul.f32 %v827, %v831
    %v833 = vmul.f32 %v799, %v832
    %vm834 = vcmp.eq.f32.partialorder %v799, inf
    %v835 = vsel %vm834, %v799, %v833
    %vm836 = vcmp.eq.f32.partialorder %v799, 0.0
    %v837 = vand.u32 %v799, 2147483648
    %v838 = vsel %vm836, %v837, %v835
    %v839 = vrsqrt.pop %v802
    %v840 = vmul.f32 %v839, %v802
    %v841 = vmul.f32 %v840, %v839
    %v842 = vmul.f32 0.5, %v841
    %v843 = vsub.f32 1.5, %v842
    %v844 = vmul.f32 %v839, %v843
    %v845 = vmul.f32 %v802, %v844
    %vm846 = vcmp.eq.f32.partialorder %v802, inf
    %v847 = vsel %vm846, %v802, %v845
    %vm848 = vcmp.eq.f32.partialorder %v802, 0.0
    %v849 = vand.u32 %v802, 2147483648
    %v850 = vsel %vm848, %v849, %v847
    %v851 = vadd.f32 %v814, 1e-10
    %v852 = vadd.f32 %v826, 1e-10
    %v853 = vadd.f32 %v838, 1e-10
    %v854 = vadd.f32 %v850, 1e-10
    %v855 = vrcp.pop %v851
    %v856 = vmul.f32 %v851, %v855
    %v857 = vsub.f32 1.0, %v856
    %v858 = vmul.f32 %v855, %v857
    %v859 = vadd.f32 %v855, %v858
    %vm860 = vweird.f32 %v851
    %vm861 = vweird.f32 %v855
    %vm862 = vmor %vm860, %vm861
    %v863 = vsel %vm862, %v855, %v859
    %v864 = vand.u32 2147483647, %v851
    %vm865 = vcmp.eq.f32.partialorder %v864, 8.507059e+37
    %v866 = vand.u32 %v851, 2147483648
    %v867 = vor.u32 1.1754944e-38, %v866
    %v868 = vsel %vm865, %v867, %v863
    %v869 = vmul.f32 %v783, %v868
    %v870 = vrcp.pop %v852
    %v871 = vmul.f32 %v852, %v870
    %v872 = vsub.f32 1.0, %v871
    %v873 = vmul.f32 %v870, %v872
    %v874 = vadd.f32 %v870, %v873
    %vm875 = vweird.f32 %v852
    %vm876 = vweird.f32 %v870
    %vm877 = vmor %vm875, %vm876
    %v878 = vsel %vm877, %v870, %v874
    %v879 = vand.u32 2147483647, %v852
    %vm880 = vcmp.eq.f32.partialorder %v879, 8.507059e+37
    %v881 = vand.u32 %v852, 2147483648
    %v882 = vor.u32 1.1754944e-38, %v881
    %v883 = vsel %vm880, %v882, %v878
    %v884 = vmul.f32 %v784, %v883
    %v885 = vrcp.pop %v853
    %v886 = vmul.f32 %v853, %v885
    %v887 = vsub.f32 1.0, %v886
    %v888 = vmul.f32 %v885, %v887
    %v889 = vadd.f32 %v885, %v888
    %vm890 = vweird.f32 %v853
    %vm891 = vweird.f32 %v885
    %vm892 = vmor %vm890, %vm891
    %v893 = vsel %vm892, %v885, %v889
    %v894 = vand.u32 2147483647, %v853
    %vm895 = vcmp.eq.f32.partialorder %v894, 8.507059e+37
    %v896 = vand.u32 %v853, 2147483648
    %v897 = vor.u32 1.1754944e-38, %v896
    %v898 = vsel %vm895, %v897, %v893
    %v899 = vmul.f32 %v785, %v898
    %v900 = vrcp.pop %v854
    %v901 = vmul.f32 %v854, %v900
    %v902 = vsub.f32 1.0, %v901
    %v903 = vmul.f32 %v900, %v902
    %v904 = vadd.f32 %v900, %v903
    %vm905 = vweird.f32 %v854
    %vm906 = vweird.f32 %v900
    %vm907 = vmor %vm905, %vm906
    %v908 = vsel %vm907, %v900, %v904
    %v909 = vand.u32 2147483647, %v854
    %vm910 = vcmp.eq.f32.partialorder %v909, 8.507059e+37
    %v911 = vand.u32 %v854, 2147483648
    %v912 = vor.u32 1.1754944e-38, %v911
    %v913 = vsel %vm910, %v912, %v908
    %v914 = vmul.f32 %v786, %v913
    %v916 = vsel %vm655, %v77, 0
    %v919 = vsel %vm655, %v78, 0
    %v922 = vsel %vm655, %v79, 0
    %v925 = vsel %vm655, %v80, 0
    %927 = vmatpush.msra.mxu0 0.0
    %928 = vmatpush.msra.mxu0 0.0
    %929 = vmatpush.msra.mxu0 0.0
    %930 = vmatpush.msra.mxu0 0.0
    %931 = vmatpush.msra.mxu0 0.0
    %932 = vmatpush.msra.mxu0 0.0
    %933 = vmatpush.msra.mxu0 0.0
    %934 = vmatpush.msra.mxu0 0.0
    %935 = vmatpush.msra.mxu0 0.0
    %936 = vmatpush.msra.mxu0 0.0
    %937 = vmatpush.msra.mxu0 0.0
    %938 = vmatpush.msra.mxu0 0.0
    %939 = vmatpush.msra.mxu0 %v914
    %940 = vmatpush.msra.mxu0 %v899
    %941 = vmatpush.msra.mxu0 %v884
    %942 = vmatpush.msra.mxu0 %v869
    %943 = vmatmul.f32.gmra.mxu0 %v916
    %v944 = vpop.f32.mrf.mxu0
    %v945 = vadd.f32 0.0, %v944
    %946 = vmatmul.f32.gmra.mxu0 %v919
    %v947 = vpop.f32.mrf.mxu0
    %v948 = vadd.f32 0.0, %v947
    %949 = vmatmul.f32.gmra.mxu0 %v922
    %v950 = vpop.f32.mrf.mxu0
    %v951 = vadd.f32 0.0, %v950
    %952 = vmatmul.f32.gmra.mxu0 %v925
    %v953 = vpop.f32.mrf.mxu0
    %v954 = vadd.f32 0.0, %v953
    %955 = vdwg.mxu0
    %v956 = vsub.f32 %v701, %v945
    %v957 = vsub.f32 %v702, %v948
    %v958 = vsub.f32 %v703, %v951
    %v959 = vsub.f32 %v704, %v954
    %v960 = vld [vmem:[%s7] sm:$0xff]
    %v961 = vld [vmem:[%s7 + $0x8] sm:$0xff]
    %v962 = vld [vmem:[%s7 + $0x10] sm:$0xff]
    %v963 = vld [vmem:[%s7 + $0x18] sm:$0xff]
    %v964 = vld [vmem:[%s7 + $0x20] sm:$0xff]
    %v965 = vld [vmem:[%s7 + $0x28] sm:$0xff]
    %v966 = vld [vmem:[%s7 + $0x30] sm:$0xff]
    %v967 = vld [vmem:[%s7 + $0x38] sm:$0xff]
    %v968 = vld [vmem:[%s8] sm:$0x1]
    %v970 = vperm.slane %v968, 0
    %v973 = vsel %vm83, %v956, 0
    %v976 = vsel %vm83, %v957, 0
    %v979 = vsel %vm83, %v958, 0
    %v982 = vsel %vm83, %v959, 0
    %984 = vmatpush.msra.mxu0 0.0
    %985 = vmatpush.msra.mxu0 0.0
    %986 = vmatpush.msra.mxu0 0.0
    %987 = vmatpush.msra.mxu0 0.0
    %988 = vmatpush.msra.mxu0 0.0
    %989 = vmatpush.msra.mxu0 0.0
    %990 = vmatpush.msra.mxu0 0.0
    %991 = vmatpush.msra.mxu0 0.0
    %992 = vmatpush.msra.mxu0 %v967
    %993 = vmatpush.msra.mxu0 %v966
    %994 = vmatpush.msra.mxu0 %v965
    %995 = vmatpush.msra.mxu0 %v964
    %996 = vmatpush.msra.mxu0 %v963
    %997 = vmatpush.msra.mxu0 %v962
    %998 = vmatpush.msra.mxu0 %v961
    %999 = vmatpush.msra.mxu0 %v960
    %1000 = vmatmul.f32.gmra.mxu0 %v973
    %v1001 = vpop.f32.mrf.mxu0
    %v1002 = vadd.f32 %v970, %v1001
    %1003 = vmatmul.f32.gmra.mxu0 %v976
    %v1004 = vpop.f32.mrf.mxu0
    %v1005 = vadd.f32 %v970, %v1004
    %1006 = vmatmul.f32.gmra.mxu0 %v979
    %v1007 = vpop.f32.mrf.mxu0
    %v1008 = vadd.f32 %v970, %v1007
    %1009 = vmatmul.f32.gmra.mxu0 %v982
    %v1010 = vpop.f32.mrf.mxu0
    %v1011 = vadd.f32 %v970, %v1010
    %1012 = vdwg.mxu0
    %v1013 = vmul.f32 %v1002, 0.5
    %v1014 = vmul.f32 %v1005, 0.5
    %v1015 = vmul.f32 %v1008, 0.5
    %v1016 = vmul.f32 %v1011, 0.5
    %v1017 = vadd.f32 %v1013, %v956
    %v1018 = vadd.f32 %v1014, %v957
    %v1019 = vadd.f32 %v1015, %v958
    %v1020 = vadd.f32 %v1016, %v959
    %1021 = vmatpush.msra.mxu0 0.0
    %1022 = vmatpush.msra.mxu0 0.0
    %1023 = vmatpush.msra.mxu0 0.0
    %1024 = vmatpush.msra.mxu0 0.0
    %1025 = vmatpush.msra.mxu0 0.0
    %1026 = vmatpush.msra.mxu0 0.0
    %1027 = vmatpush.msra.mxu0 0.0
    %1028 = vmatpush.msra.mxu0 0.0
    %1029 = vmatpush.msra.mxu0 0.0
    %1030 = vmatpush.msra.mxu0 0.0
    %1031 = vmatpush.msra.mxu0 0.0
    %1032 = vmatpush.msra.mxu0 0.0
    %1033 = vmatpush.msra.mxu0 %v1020
    %1034 = vmatpush.msra.mxu0 %v1019
    %1035 = vmatpush.msra.mxu0 %v1018
    %1036 = vmatpush.msra.mxu0 %v1017
    %1037 = vmatmul.f32.gmra.mxu0 %v706
    %v1038 = vpop.f32.mrf.mxu0
    %v1039 = vadd.f32 0.0, %v1038
    %1040 = vmatmul.f32.gmra.mxu0 %v709
    %v1041 = vpop.f32.mrf.mxu0
    %v1042 = vadd.f32 0.0, %v1041
    %1043 = vmatmul.f32.gmra.mxu0 %v712
    %v1044 = vpop.f32.mrf.mxu0
    %v1045 = vadd.f32 0.0, %v1044
    %1046 = vmatmul.f32.gmra.mxu0 %v715
    %v1047 = vpop.f32.mrf.mxu0
    %v1048 = vadd.f32 0.0, %v1047
    %1049 = vdwg.mxu0
    %v1050 = vmul.f32 %v1039, 1e-10
    %v1051 = vmul.f32 %v1042, 1e-10
    %v1052 = vmul.f32 %v1045, 1e-10
    %v1053 = vmul.f32 %v1048, 1e-10
    %v1054 = vsub.f32 %v1017, %v1050
    %v1055 = vsub.f32 %v1018, %v1051
    %v1056 = vsub.f32 %v1019, %v1052
    %v1057 = vsub.f32 %v1020, %v1053
    %1058 = vmatpush.msra.mxu0 0.0
    %1059 = vmatpush.msra.mxu0 0.0
    %1060 = vmatpush.msra.mxu0 0.0
    %1061 = vmatpush.msra.mxu0 0.0
    %1062 = vmatpush.msra.mxu0 0.0
    %1063 = vmatpush.msra.mxu0 0.0
    %1064 = vmatpush.msra.mxu0 0.0
    %1065 = vmatpush.msra.mxu0 0.0
    %1066 = vmatpush.msra.mxu0 0.0
    %1067 = vmatpush.msra.mxu0 0.0
    %1068 = vmatpush.msra.mxu0 0.0
    %1069 = vmatpush.msra.mxu0 0.0
    %1070 = vmatpush.msra.mxu0 %v1057
    %1071 = vmatpush.msra.mxu0 %v1056
    %1072 = vmatpush.msra.mxu0 %v1055
    %1073 = vmatpush.msra.mxu0 %v1054
    %1074 = vmatmul.f32.gmra.mxu0 %v706
    %v1075 = vpop.f32.mrf.mxu0
    %v1076 = vadd.f32 0.0, %v1075
    %1077 = vmatmul.f32.gmra.mxu0 %v709
    %v1078 = vpop.f32.mrf.mxu0
    %v1079 = vadd.f32 0.0, %v1078
    %1080 = vmatmul.f32.gmra.mxu0 %v712
    %v1081 = vpop.f32.mrf.mxu0
    %v1082 = vadd.f32 0.0, %v1081
    %1083 = vmatmul.f32.gmra.mxu0 %v715
    %v1084 = vpop.f32.mrf.mxu0
    %v1085 = vadd.f32 0.0, %v1084
    %1086 = vdwg.mxu0
    %v1087 = vsub.f32 %v1076, %v1054
    %v1088 = vsub.f32 %v1079, %v1055
    %v1089 = vsub.f32 %v1082, %v1056
    %v1090 = vsub.f32 %v1085, %v1057
    %v1091 = vmul.f32 %v1087, %v1087
    %v1092 = vmul.f32 %v1088, %v1088
    %v1093 = vmul.f32 %v1089, %v1089
    %v1094 = vmul.f32 %v1090, %v1090
    %v1095 = vsel %vm83, %v1091, 0.0
    %1096 = vadd.xlane.f32.xlu0 %v1095
    %v1097 = vpop.xlane.xlu0 %1096
    %v1098 = vsel %vm83, %v1092, 0.0
    %1099 = vadd.xlane.f32.xlu0 %v1098
    %v1100 = vpop.xlane.xlu0 %1099
    %v1101 = vsel %vm83, %v1093, 0.0
    %1102 = vadd.xlane.f32.xlu0 %v1101
    %v1103 = vpop.xlane.xlu0 %1102
    %v1104 = vsel %vm83, %v1094, 0.0
    %1105 = vadd.xlane.f32.xlu0 %v1104
    %v1106 = vpop.xlane.xlu0 %1105
    %v1107 = vrsqrt.pop %v1097
    %v1108 = vmul.f32 %v1107, %v1097
    %v1109 = vmul.f32 %v1108, %v1107
    %v1110 = vmul.f32 0.5, %v1109
    %v1111 = vsub.f32 1.5, %v1110
    %v1112 = vmul.f32 %v1107, %v1111
    %v1113 = vmul.f32 %v1097, %v1112
    %vm1114 = vcmp.eq.f32.partialorder %v1097, inf
    %v1115 = vsel %vm1114, %v1097, %v1113
    %vm1116 = vcmp.eq.f32.partialorder %v1097, 0.0
    %v1117 = vand.u32 %v1097, 2147483648
    %v1118 = vsel %vm1116, %v1117, %v1115
    %v1119 = vrsqrt.pop %v1100
    %v1120 = vmul.f32 %v1119, %v1100
    %v1121 = vmul.f32 %v1120, %v1119
    %v1122 = vmul.f32 0.5, %v1121
    %v1123 = vsub.f32 1.5, %v1122
    %v1124 = vmul.f32 %v1119, %v1123
    %v1125 = vmul.f32 %v1100, %v1124
    %vm1126 = vcmp.eq.f32.partialorder %v1100, inf
    %v1127 = vsel %vm1126, %v1100, %v1125
    %vm1128 = vcmp.eq.f32.partialorder %v1100, 0.0
    %v1129 = vand.u32 %v1100, 2147483648
    %v1130 = vsel %vm1128, %v1129, %v1127
    %v1131 = vrsqrt.pop %v1103
    %v1132 = vmul.f32 %v1131, %v1103
    %v1133 = vmul.f32 %v1132, %v1131
    %v1134 = vmul.f32 0.5, %v1133
    %v1135 = vsub.f32 1.5, %v1134
    %v1136 = vmul.f32 %v1131, %v1135
    %v1137 = vmul.f32 %v1103, %v1136
    %vm1138 = vcmp.eq.f32.partialorder %v1103, inf
    %v1139 = vsel %vm1138, %v1103, %v1137
    %vm1140 = vcmp.eq.f32.partialorder %v1103, 0.0
    %v1141 = vand.u32 %v1103, 2147483648
    %v1142 = vsel %vm1140, %v1141, %v1139
    %v1143 = vrsqrt.pop %v1106
    %v1144 = vmul.f32 %v1143, %v1106
    %v1145 = vmul.f32 %v1144, %v1143
    %v1146 = vmul.f32 0.5, %v1145
    %v1147 = vsub.f32 1.5, %v1146
    %v1148 = vmul.f32 %v1143, %v1147
    %v1149 = vmul.f32 %v1106, %v1148
    %vm1150 = vcmp.eq.f32.partialorder %v1106, inf
    %v1151 = vsel %vm1150, %v1106, %v1149
    %vm1152 = vcmp.eq.f32.partialorder %v1106, 0.0
    %v1153 = vand.u32 %v1106, 2147483648
    %v1154 = vsel %vm1152, %v1153, %v1151
    %v1155 = vadd.f32 %v1118, 1e-10
    %v1156 = vadd.f32 %v1130, 1e-10
    %v1157 = vadd.f32 %v1142, 1e-10
    %v1158 = vadd.f32 %v1154, 1e-10
    %v1159 = vrcp.pop %v1155
    %v1160 = vmul.f32 %v1155, %v1159
    %v1161 = vsub.f32 1.0, %v1160
    %v1162 = vmul.f32 %v1159, %v1161
    %v1163 = vadd.f32 %v1159, %v1162
    %vm1164 = vweird.f32 %v1155
    %vm1165 = vweird.f32 %v1159
    %vm1166 = vmor %vm1164, %vm1165
    %v1167 = vsel %vm1166, %v1159, %v1163
    %v1168 = vand.u32 2147483647, %v1155
    %vm1169 = vcmp.eq.f32.partialorder %v1168, 8.507059e+37
    %v1170 = vand.u32 %v1155, 2147483648
    %v1171 = vor.u32 1.1754944e-38, %v1170
    %v1172 = vsel %vm1169, %v1171, %v1167
    %v1173 = vmul.f32 %v1087, %v1172
    %v1174 = vrcp.pop %v1156
    %v1175 = vmul.f32 %v1156, %v1174
    %v1176 = vsub.f32 1.0, %v1175
    %v1177 = vmul.f32 %v1174, %v1176
    %v1178 = vadd.f32 %v1174, %v1177
    %vm1179 = vweird.f32 %v1156
    %vm1180 = vweird.f32 %v1174
    %vm1181 = vmor %vm1179, %vm1180
    %v1182 = vsel %vm1181, %v1174, %v1178
    %v1183 = vand.u32 2147483647, %v1156
    %vm1184 = vcmp.eq.f32.partialorder %v1183, 8.507059e+37
    %v1185 = vand.u32 %v1156, 2147483648
    %v1186 = vor.u32 1.1754944e-38, %v1185
    %v1187 = vsel %vm1184, %v1186, %v1182
    %v1188 = vmul.f32 %v1088, %v1187
    %v1189 = vrcp.pop %v1157
    %v1190 = vmul.f32 %v1157, %v1189
    %v1191 = vsub.f32 1.0, %v1190
    %v1192 = vmul.f32 %v1189, %v1191
    %v1193 = vadd.f32 %v1189, %v1192
    %vm1194 = vweird.f32 %v1157
    %vm1195 = vweird.f32 %v1189
    %vm1196 = vmor %vm1194, %vm1195
    %v1197 = vsel %vm1196, %v1189, %v1193
    %v1198 = vand.u32 2147483647, %v1157
    %vm1199 = vcmp.eq.f32.partialorder %v1198, 8.507059e+37
    %v1200 = vand.u32 %v1157, 2147483648
    %v1201 = vor.u32 1.1754944e-38, %v1200
    %v1202 = vsel %vm1199, %v1201, %v1197
    %v1203 = vmul.f32 %v1089, %v1202
    %v1204 = vrcp.pop %v1158
    %v1205 = vmul.f32 %v1158, %v1204
    %v1206 = vsub.f32 1.0, %v1205
    %v1207 = vmul.f32 %v1204, %v1206
    %v1208 = vadd.f32 %v1204, %v1207
    %vm1209 = vweird.f32 %v1158
    %vm1210 = vweird.f32 %v1204
    %vm1211 = vmor %vm1209, %vm1210
    %v1212 = vsel %vm1211, %v1204, %v1208
    %v1213 = vand.u32 2147483647, %v1158
    %vm1214 = vcmp.eq.f32.partialorder %v1213, 8.507059e+37
    %v1215 = vand.u32 %v1158, 2147483648
    %v1216 = vor.u32 1.1754944e-38, %v1215
    %v1217 = vsel %vm1214, %v1216, %v1212
    %v1218 = vmul.f32 %v1090, %v1217
    %1219 = vmatpush.msra.mxu0 0.0
    %1220 = vmatpush.msra.mxu0 0.0
    %1221 = vmatpush.msra.mxu0 0.0
    %1222 = vmatpush.msra.mxu0 0.0
    %1223 = vmatpush.msra.mxu0 0.0
    %1224 = vmatpush.msra.mxu0 0.0
    %1225 = vmatpush.msra.mxu0 0.0
    %1226 = vmatpush.msra.mxu0 0.0
    %1227 = vmatpush.msra.mxu0 0.0
    %1228 = vmatpush.msra.mxu0 0.0
    %1229 = vmatpush.msra.mxu0 0.0
    %1230 = vmatpush.msra.mxu0 0.0
    %1231 = vmatpush.msra.mxu0 %v1218
    %1232 = vmatpush.msra.mxu0 %v1203
    %1233 = vmatpush.msra.mxu0 %v1188
    %1234 = vmatpush.msra.mxu0 %v1173
    %1235 = vmatmul.f32.gmra.mxu0 %v916
    %v1236 = vpop.f32.mrf.mxu0
    %v1237 = vadd.f32 0.0, %v1236
    %1238 = vmatmul.f32.gmra.mxu0 %v919
    %v1239 = vpop.f32.mrf.mxu0
    %v1240 = vadd.f32 0.0, %v1239
    %1241 = vmatmul.f32.gmra.mxu0 %v922
    %v1242 = vpop.f32.mrf.mxu0
    %v1243 = vadd.f32 0.0, %v1242
    %1244 = vmatmul.f32.gmra.mxu0 %v925
    %v1245 = vpop.f32.mrf.mxu0
    %v1246 = vadd.f32 0.0, %v1245
    %1247 = vdwg.mxu0
    %v1248 = vsub.f32 %v1017, %v1237
    %v1249 = vsub.f32 %v1018, %v1240
    %v1250 = vsub.f32 %v1019, %v1243
    %v1251 = vsub.f32 %v1020, %v1246
    %s1252 = scalar_lea.vmem %s3, 1
    %v1253 = vld [vmem:[%s1252] sm:$0x1]
    %s1254 = scalar_lea.vmem %s4, 1
    %v1255 = vld [vmem:[%s1254] sm:$0x1]
    %v1256 = vsel %vm83, %v1248, 0.0
    %1257 = vadd.xlane.f32.xlu0 %v1256
    %v1258 = vpop.xlane.xlu0 %1257
    %v1259 = vsel %vm83, %v1249, 0.0
    %1260 = vadd.xlane.f32.xlu0 %v1259
    %v1261 = vpop.xlane.xlu0 %1260
    %v1262 = vsel %vm83, %v1250, 0.0
    %1263 = vadd.xlane.f32.xlu0 %v1262
    %v1264 = vpop.xlane.xlu0 %1263
    %v1265 = vsel %vm83, %v1251, 0.0
    %1266 = vadd.xlane.f32.xlu0 %v1265
    %v1267 = vpop.xlane.xlu0 %1266
    %v1268 = vmul.f32 %v1258, %v102
    %v1269 = vmul.f32 %v1261, %v102
    %v1270 = vmul.f32 %v1264, %v102
    %v1271 = vmul.f32 %v1267, %v102
    %v1272 = vsub.f32 %v1248, %v1268
    %v1273 = vsub.f32 %v1249, %v1269
    %v1274 = vsub.f32 %v1250, %v1270
    %v1275 = vsub.f32 %v1251, %v1271
    %v1276 = vmul.f32 %v1272, %v1272
    %v1277 = vmul.f32 %v1273, %v1273
    %v1278 = vmul.f32 %v1274, %v1274
    %v1279 = vmul.f32 %v1275, %v1275
    %v1280 = vsel %vm83, %v1276, 0.0
    %1281 = vadd.xlane.f32.xlu0 %v1280
    %v1282 = vpop.xlane.xlu0 %1281
    %v1283 = vsel %vm83, %v1277, 0.0
    %1284 = vadd.xlane.f32.xlu0 %v1283
    %v1285 = vpop.xlane.xlu0 %1284
    %v1286 = vsel %vm83, %v1278, 0.0
    %1287 = vadd.xlane.f32.xlu0 %v1286
    %v1288 = vpop.xlane.xlu0 %1287
    %v1289 = vsel %vm83, %v1279, 0.0
    %1290 = vadd.xlane.f32.xlu0 %v1289
    %v1291 = vpop.xlane.xlu0 %1290
    %v1292 = vmul.f32 %v1282, %v102
    %v1293 = vmul.f32 %v1285, %v102
    %v1294 = vmul.f32 %v1288, %v102
    %v1295 = vmul.f32 %v1291, %v102
    %v1296 = vadd.f32 %v1292, 1e-05
    %v1297 = vadd.f32 %v1293, 1e-05
    %v1298 = vadd.f32 %v1294, 1e-05
    %v1299 = vadd.f32 %v1295, 1e-05
    %v1300 = vrsqrt.pop %v1296
    %v1301 = vmul.f32 %v1300, %v1296
    %v1302 = vmul.f32 %v1301, %v1300
    %v1303 = vmul.f32 0.5, %v1302
    %v1304 = vsub.f32 1.5, %v1303
    %v1305 = vmul.f32 %v1300, %v1304
    %vm1306 = vweird.f32 %v1296
    %vm1307 = vweird.f32 %v1300
    %vm1308 = vmor %vm1306, %vm1307
    %v1309 = vsel %vm1308, %v1300, %v1305
    %v1310 = vrsqrt.pop %v1297
    %v1311 = vmul.f32 %v1310, %v1297
    %v1312 = vmul.f32 %v1311, %v1310
    %v1313 = vmul.f32 0.5, %v1312
    %v1314 = vsub.f32 1.5, %v1313
    %v1315 = vmul.f32 %v1310, %v1314
    %vm1316 = vweird.f32 %v1297
    %vm1317 = vweird.f32 %v1310
    %vm1318 = vmor %vm1316, %vm1317
    %v1319 = vsel %vm1318, %v1310, %v1315
    %v1320 = vrsqrt.pop %v1298
    %v1321 = vmul.f32 %v1320, %v1298
    %v1322 = vmul.f32 %v1321, %v1320
    %v1323 = vmul.f32 0.5, %v1322
    %v1324 = vsub.f32 1.5, %v1323
    %v1325 = vmul.f32 %v1320, %v1324
    %vm1326 = vweird.f32 %v1298
    %vm1327 = vweird.f32 %v1320
    %vm1328 = vmor %vm1326, %vm1327
    %v1329 = vsel %vm1328, %v1320, %v1325
    %v1330 = vrsqrt.pop %v1299
    %v1331 = vmul.f32 %v1330, %v1299
    %v1332 = vmul.f32 %v1331, %v1330
    %v1333 = vmul.f32 0.5, %v1332
    %v1334 = vsub.f32 1.5, %v1333
    %v1335 = vmul.f32 %v1330, %v1334
    %vm1336 = vweird.f32 %v1299
    %vm1337 = vweird.f32 %v1330
    %vm1338 = vmor %vm1336, %vm1337
    %v1339 = vsel %vm1338, %v1330, %v1335
    %v1340 = vmul.f32 %v1272, %v1309
    %v1341 = vmul.f32 %v1273, %v1319
    %v1342 = vmul.f32 %v1274, %v1329
    %v1343 = vmul.f32 %v1275, %v1339
    %v1345 = vperm.slane %v1253, 0
    %v1347 = vmul.f32 %v1340, %v1345
    %v1348 = vmul.f32 %v1341, %v1345
    %v1349 = vmul.f32 %v1342, %v1345
    %v1350 = vmul.f32 %v1343, %v1345
    %v1352 = vperm.slane %v1255, 0
    %v1354 = vadd.f32 %v1347, %v1352
    %v1355 = vadd.f32 %v1348, %v1352
    %v1356 = vadd.f32 %v1349, %v1352
    %v1357 = vadd.f32 %v1350, %v1352
    %s1358 = scalar_lea.vmem %s5, 64
    %v1359 = vld [vmem:[%s1358] sm:$0xff]
    %v1360 = vld [vmem:[%s1358 + $0x8] sm:$0xff]
    %v1361 = vld [vmem:[%s1358 + $0x10] sm:$0xff]
    %v1362 = vld [vmem:[%s1358 + $0x18] sm:$0xff]
    %v1363 = vld [vmem:[%s1358 + $0x20] sm:$0xff]
    %v1364 = vld [vmem:[%s1358 + $0x28] sm:$0xff]
    %v1365 = vld [vmem:[%s1358 + $0x30] sm:$0xff]
    %v1366 = vld [vmem:[%s1358 + $0x38] sm:$0xff]
    %v1368 = vsel %vm83, %v1354, 0
    %v1371 = vsel %vm83, %v1355, 0
    %v1374 = vsel %vm83, %v1356, 0
    %v1377 = vsel %vm83, %v1357, 0
    %1379 = vmatpush.msra.mxu0 0.0
    %1380 = vmatpush.msra.mxu0 0.0
    %1381 = vmatpush.msra.mxu0 0.0
    %1382 = vmatpush.msra.mxu0 0.0
    %1383 = vmatpush.msra.mxu0 0.0
    %1384 = vmatpush.msra.mxu0 0.0
    %1385 = vmatpush.msra.mxu0 0.0
    %1386 = vmatpush.msra.mxu0 0.0
    %1387 = vmatpush.msra.mxu0 %v1366
    %1388 = vmatpush.msra.mxu0 %v1365
    %1389 = vmatpush.msra.mxu0 %v1364
    %1390 = vmatpush.msra.mxu0 %v1363
    %1391 = vmatpush.msra.mxu0 %v1362
    %1392 = vmatpush.msra.mxu0 %v1361
    %1393 = vmatpush.msra.mxu0 %v1360
    %1394 = vmatpush.msra.mxu0 %v1359
    %1395 = vmatmul.f32.gmra.mxu0 %v1368
    %v1396 = vpop.f32.mrf.mxu0
    %v1397 = vadd.f32 0.0, %v1396
    %1398 = vmatmul.f32.gmra.mxu0 %v1371
    %v1399 = vpop.f32.mrf.mxu0
    %v1400 = vadd.f32 0.0, %v1399
    %1401 = vmatmul.f32.gmra.mxu0 %v1374
    %v1402 = vpop.f32.mrf.mxu0
    %v1403 = vadd.f32 0.0, %v1402
    %1404 = vmatmul.f32.gmra.mxu0 %v1377
    %v1405 = vpop.f32.mrf.mxu0
    %v1406 = vadd.f32 0.0, %v1405
    %1407 = vdwg.mxu0
    %1410 = vrot.lane.b32.xlu0 %v1397, 96
    %v1411 = vpop.permute.xlu0 %1410
    %1412 = vrot.lane.b32.xlu0 %v1400, 96
    %v1413 = vpop.permute.xlu0 %1412
    %v1414 = vsel %vm248, %v1397, 0
    %v1416 = vsel %vm248, %v1400, 0
    %v1418 = vsel %vm248, %v1411, 0
    %v1420 = vsel %vm248, %v1413, 0
    %1422 = vmatpush.xpose.msra.mxu0 0.0
    %1423 = vmatpush.xpose.msra.mxu0 0.0
    %1424 = vmatpush.xpose.msra.mxu0 0.0
    %1425 = vmatpush.xpose.msra.mxu0 0.0
    %1426 = vmatpush.xpose.msra.mxu0 0.0
    %1427 = vmatpush.xpose.msra.mxu0 0.0
    %1428 = vmatpush.xpose.msra.mxu0 0.0
    %1429 = vmatpush.xpose.msra.mxu0 0.0
    %1430 = vmatpush.xpose.msra.mxu0 0.0
    %1431 = vmatpush.xpose.msra.mxu0 0.0
    %1432 = vmatpush.xpose.msra.mxu0 0.0
    %1433 = vmatpush.xpose.msra.mxu0 0.0
    %1434 = vmatpush.xpose.msra.mxu0 0.0
    %1435 = vmatpush.xpose.msra.mxu0 0.0
    %1436 = vmatpush.xpose.msra.mxu0 %v1420
    %1437 = vmatpush.xpose.msra.mxu0 %v1418
    %1438 = vmatmul.f32.gmra.mxu0 %v1414
    %v1439 = vpop.f32.mrf.mxu0
    %v1440 = vadd.f32 0.0, %v1439
    %1441 = vmatmul.f32.gmra.mxu0 %v1416
    %v1442 = vpop.f32.mrf.mxu0
    %v1443 = vadd.f32 0.0, %v1442
    %1444 = vdwg.mxu0
    %v1445 = vmul.f32 %v1440, 0.25
    %v1446 = vmul.f32 %v1443, 0.25
    %v1447 = vsel %vm248, %v1445, -inf
    %1448 = vmax.xlane.f32.xlu0 %v1447
    %v1449 = vpop.xlane.xlu0 %1448
    %v1450 = vsel %vm248, %v1446, -inf
    %1451 = vmax.xlane.f32.xlu0 %v1450
    %v1452 = vpop.xlane.xlu0 %1451
    %v1453 = vsub.f32 %v1445, %v1449
    %v1454 = vsub.f32 %v1446, %v1452
    %v1455 = vmul.f32 %v1453, 1.442695
    %v1456 = vpow.pop %v1455
    %v1457 = vmul.f32 %v1454, 1.442695
    %v1458 = vpow.pop %v1457
    %v1459 = vsel %vm248, %v1456, 0.0
    %1460 = vadd.xlane.f32.xlu0 %v1459
    %v1461 = vpop.xlane.xlu0 %1460
    %v1462 = vsel %vm248, %v1458, 0.0
    %1463 = vadd.xlane.f32.xlu0 %v1462
    %v1464 = vpop.xlane.xlu0 %1463
    %v1465 = vrcp.pop %v1461
    %v1466 = vrcp.pop %v1464
    %v1467 = vmul.f32 %v1456, %v1465
    %v1468 = vmul.f32 %v1458, %v1466
    %1469 = vrot.lane.b32.xlu0 %v1397, 64
    %v1470 = vpop.permute.xlu0 %1469
    %1471 = vrot.lane.b32.xlu0 %v1400, 64
    %v1472 = vpop.permute.xlu0 %1471
    %v1476 = vsel %vm248, %v1467, 0
    %v1479 = vsel %vm248, %v1468, 0
    %1481 = vmatpush.msra.mxu0 0.0
    %1482 = vmatpush.msra.mxu0 0.0
    %1483 = vmatpush.msra.mxu0 0.0
    %1484 = vmatpush.msra.mxu0 0.0
    %1485 = vmatpush.msra.mxu0 0.0
    %1486 = vmatpush.msra.mxu0 0.0
    %1487 = vmatpush.msra.mxu0 0.0
    %1488 = vmatpush.msra.mxu0 0.0
    %1489 = vmatpush.msra.mxu0 0.0
    %1490 = vmatpush.msra.mxu0 0.0
    %1491 = vmatpush.msra.mxu0 0.0
    %1492 = vmatpush.msra.mxu0 0.0
    %1493 = vmatpush.msra.mxu0 0.0
    %1494 = vmatpush.msra.mxu0 0.0
    %1495 = vmatpush.msra.mxu0 %v1472
    %1496 = vmatpush.msra.mxu0 %v1470
    %1497 = vmatmul.f32.gmra.mxu0 %v1476
    %v1498 = vpop.f32.mrf.mxu0
    %v1499 = vadd.f32 0.0, %v1498
    %1500 = vmatmul.f32.gmra.mxu0 %v1479
    %v1501 = vpop.f32.mrf.mxu0
    %v1502 = vadd.f32 0.0, %v1501
    %1503 = vdwg.mxu0
    %1504 = vrot.lane.b32.xlu0 %v1397, 112
    %v1505 = vpop.permute.xlu0 %1504
    %1506 = vrot.lane.b32.xlu0 %v1400, 112
    %v1507 = vpop.permute.xlu0 %1506
    %1508 = vrot.lane.b32.xlu0 %v1397, 80
    %v1509 = vpop.permute.xlu0 %1508
    %1510 = vrot.lane.b32.xlu0 %v1400, 80
    %v1511 = vpop.permute.xlu0 %1510
    %v1512 = vsel %vm248, %v1505, 0
    %v1514 = vsel %vm248, %v1507, 0
    %v1516 = vsel %vm248, %v1509, 0
    %v1518 = vsel %vm248, %v1511, 0
    %1520 = vmatpush.xpose.msra.mxu0 0.0
    %1521 = vmatpush.xpose.msra.mxu0 0.0
    %1522 = vmatpush.xpose.msra.mxu0 0.0
    %1523 = vmatpush.xpose.msra.mxu0 0.0
    %1524 = vmatpush.xpose.msra.mxu0 0.0
    %1525 = vmatpush.xpose.msra.mxu0 0.0
    %1526 = vmatpush.xpose.msra.mxu0 0.0
    %1527 = vmatpush.xpose.msra.mxu0 0.0
    %1528 = vmatpush.xpose.msra.mxu0 0.0
    %1529 = vmatpush.xpose.msra.mxu0 0.0
    %1530 = vmatpush.xpose.msra.mxu0 0.0
    %1531 = vmatpush.xpose.msra.mxu0 0.0
    %1532 = vmatpush.xpose.msra.mxu0 0.0
    %1533 = vmatpush.xpose.msra.mxu0 0.0
    %1534 = vmatpush.xpose.msra.mxu0 %v1518
    %1535 = vmatpush.xpose.msra.mxu0 %v1516
    %1536 = vmatmul.f32.gmra.mxu0 %v1512
    %v1537 = vpop.f32.mrf.mxu0
    %v1538 = vadd.f32 0.0, %v1537
    %1539 = vmatmul.f32.gmra.mxu0 %v1514
    %v1540 = vpop.f32.mrf.mxu0
    %v1541 = vadd.f32 0.0, %v1540
    %1542 = vdwg.mxu0
    %v1543 = vmul.f32 %v1538, 0.25
    %v1544 = vmul.f32 %v1541, 0.25
    %v1545 = vsel %vm248, %v1543, -inf
    %1546 = vmax.xlane.f32.xlu0 %v1545
    %v1547 = vpop.xlane.xlu0 %1546
    %v1548 = vsel %vm248, %v1544, -inf
    %1549 = vmax.xlane.f32.xlu0 %v1548
    %v1550 = vpop.xlane.xlu0 %1549
    %v1551 = vsub.f32 %v1543, %v1547
    %v1552 = vsub.f32 %v1544, %v1550
    %v1553 = vmul.f32 %v1551, 1.442695
    %v1554 = vpow.pop %v1553
    %v1555 = vmul.f32 %v1552, 1.442695
    %v1556 = vpow.pop %v1555
    %v1557 = vsel %vm248, %v1554, 0.0
    %1558 = vadd.xlane.f32.xlu0 %v1557
    %v1559 = vpop.xlane.xlu0 %1558
    %v1560 = vsel %vm248, %v1556, 0.0
    %1561 = vadd.xlane.f32.xlu0 %v1560
    %v1562 = vpop.xlane.xlu0 %1561
    %v1563 = vrcp.pop %v1559
    %v1564 = vrcp.pop %v1562
    %v1565 = vmul.f32 %v1554, %v1563
    %v1566 = vmul.f32 %v1556, %v1564
    %1567 = vrot.lane.b32.xlu0 %v1397, 48
    %v1568 = vpop.permute.xlu0 %1567
    %1569 = vrot.lane.b32.xlu0 %v1400, 48
    %v1570 = vpop.permute.xlu0 %1569
    %v1574 = vsel %vm248, %v1565, 0
    %v1577 = vsel %vm248, %v1566, 0
    %1579 = vmatpush.msra.mxu0 0.0
    %1580 = vmatpush.msra.mxu0 0.0
    %1581 = vmatpush.msra.mxu0 0.0
    %1582 = vmatpush.msra.mxu0 0.0
    %1583 = vmatpush.msra.mxu0 0.0
    %1584 = vmatpush.msra.mxu0 0.0
    %1585 = vmatpush.msra.mxu0 0.0
    %1586 = vmatpush.msra.mxu0 0.0
    %1587 = vmatpush.msra.mxu0 0.0
    %1588 = vmatpush.msra.mxu0 0.0
    %1589 = vmatpush.msra.mxu0 0.0
    %1590 = vmatpush.msra.mxu0 0.0
    %1591 = vmatpush.msra.mxu0 0.0
    %1592 = vmatpush.msra.mxu0 0.0
    %1593 = vmatpush.msra.mxu0 %v1570
    %1594 = vmatpush.msra.mxu0 %v1568
    %1595 = vmatmul.f32.gmra.mxu0 %v1574
    %v1596 = vpop.f32.mrf.mxu0
    %v1597 = vadd.f32 0.0, %v1596
    %1598 = vmatmul.f32.gmra.mxu0 %v1577
    %v1599 = vpop.f32.mrf.mxu0
    %v1600 = vadd.f32 0.0, %v1599
    %1601 = vdwg.mxu0
    %1604 = vrot.lane.b32.xlu0 %v1597, 16
    %v1605 = vpop.permute.xlu0 %1604
    %1606 = vrot.lane.b32.xlu0 %v1600, 16
    %v1607 = vpop.permute.xlu0 %1606
    %v1610 = vsel %vm248, %v1499, %v1605
    %v1611 = vsel %vm248, %v1502, %v1607
    %1614 = vrot.lane.b32.xlu0 %v1403, 96
    %v1615 = vpop.permute.xlu0 %1614
    %1616 = vrot.lane.b32.xlu0 %v1406, 96
    %v1617 = vpop.permute.xlu0 %1616
    %v1618 = vsel %vm248, %v1403, 0
    %v1620 = vsel %vm248, %v1406, 0
    %v1622 = vsel %vm248, %v1615, 0
    %v1624 = vsel %vm248, %v1617, 0
    %1626 = vmatpush.xpose.msra.mxu0 0.0
    %1627 = vmatpush.xpose.msra.mxu0 0.0
    %1628 = vmatpush.xpose.msra.mxu0 0.0
    %1629 = vmatpush.xpose.msra.mxu0 0.0
    %1630 = vmatpush.xpose.msra.mxu0 0.0
    %1631 = vmatpush.xpose.msra.mxu0 0.0
    %1632 = vmatpush.xpose.msra.mxu0 0.0
    %1633 = vmatpush.xpose.msra.mxu0 0.0
    %1634 = vmatpush.xpose.msra.mxu0 0.0
    %1635 = vmatpush.xpose.msra.mxu0 0.0
    %1636 = vmatpush.xpose.msra.mxu0 0.0
    %1637 = vmatpush.xpose.msra.mxu0 0.0
    %1638 = vmatpush.xpose.msra.mxu0 0.0
    %1639 = vmatpush.xpose.msra.mxu0 0.0
    %1640 = vmatpush.xpose.msra.mxu0 %v1624
    %1641 = vmatpush.xpose.msra.mxu0 %v1622
    %1642 = vmatmul.f32.gmra.mxu0 %v1618
    %v1643 = vpop.f32.mrf.mxu0
    %v1644 = vadd.f32 0.0, %v1643
    %1645 = vmatmul.f32.gmra.mxu0 %v1620
    %v1646 = vpop.f32.mrf.mxu0
    %v1647 = vadd.f32 0.0, %v1646
    %1648 = vdwg.mxu0
    %v1649 = vmul.f32 %v1644, 0.25
    %v1650 = vmul.f32 %v1647, 0.25
    %v1651 = vsel %vm248, %v1649, -inf
    %1652 = vmax.xlane.f32.xlu0 %v1651
    %v1653 = vpop.xlane.xlu0 %1652
    %v1654 = vsel %vm248, %v1650, -inf
    %1655 = vmax.xlane.f32.xlu0 %v1654
    %v1656 = vpop.xlane.xlu0 %1655
    %v1657 = vsub.f32 %v1649, %v1653
    %v1658 = vsub.f32 %v1650, %v1656
    %v1659 = vmul.f32 %v1657, 1.442695
    %v1660 = vpow.pop %v1659
    %v1661 = vmul.f32 %v1658, 1.442695
    %v1662 = vpow.pop %v1661
    %v1663 = vsel %vm248, %v1660, 0.0
    %1664 = vadd.xlane.f32.xlu0 %v1663
    %v1665 = vpop.xlane.xlu0 %1664
    %v1666 = vsel %vm248, %v1662, 0.0
    %1667 = vadd.xlane.f32.xlu0 %v1666
    %v1668 = vpop.xlane.xlu0 %1667
    %v1669 = vrcp.pop %v1665
    %v1670 = vrcp.pop %v1668
    %v1671 = vmul.f32 %v1660, %v1669
    %v1672 = vmul.f32 %v1662, %v1670
    %1673 = vrot.lane.b32.xlu0 %v1403, 64
    %v1674 = vpop.permute.xlu0 %1673
    %1675 = vrot.lane.b32.xlu0 %v1406, 64
    %v1676 = vpop.permute.xlu0 %1675
    %v1680 = vsel %vm248, %v1671, 0
    %v1683 = vsel %vm248, %v1672, 0
    %1685 = vmatpush.msra.mxu0 0.0
    %1686 = vmatpush.msra.mxu0 0.0
    %1687 = vmatpush.msra.mxu0 0.0
    %1688 = vmatpush.msra.mxu0 0.0
    %1689 = vmatpush.msra.mxu0 0.0
    %1690 = vmatpush.msra.mxu0 0.0
    %1691 = vmatpush.msra.mxu0 0.0
    %1692 = vmatpush.msra.mxu0 0.0
    %1693 = vmatpush.msra.mxu0 0.0
    %1694 = vmatpush.msra.mxu0 0.0
    %1695 = vmatpush.msra.mxu0 0.0
    %1696 = vmatpush.msra.mxu0 0.0
    %1697 = vmatpush.msra.mxu0 0.0
    %1698 = vmatpush.msra.mxu0 0.0
    %1699 = vmatpush.msra.mxu0 %v1676
    %1700 = vmatpush.msra.mxu0 %v1674
    %1701 = vmatmul.f32.gmra.mxu0 %v1680
    %v1702 = vpop.f32.mrf.mxu0
    %v1703 = vadd.f32 0.0, %v1702
    %1704 = vmatmul.f32.gmra.mxu0 %v1683
    %v1705 = vpop.f32.mrf.mxu0
    %v1706 = vadd.f32 0.0, %v1705
    %1707 = vdwg.mxu0
    %1708 = vrot.lane.b32.xlu0 %v1403, 112
    %v1709 = vpop.permute.xlu0 %1708
    %1710 = vrot.lane.b32.xlu0 %v1406, 112
    %v1711 = vpop.permute.xlu0 %1710
    %1712 = vrot.lane.b32.xlu0 %v1403, 80
    %v1713 = vpop.permute.xlu0 %1712
    %1714 = vrot.lane.b32.xlu0 %v1406, 80
    %v1715 = vpop.permute.xlu0 %1714
    %v1716 = vsel %vm248, %v1709, 0
    %v1718 = vsel %vm248, %v1711, 0
    %v1720 = vsel %vm248, %v1713, 0
    %v1722 = vsel %vm248, %v1715, 0
    %1724 = vmatpush.xpose.msra.mxu0 0.0
    %1725 = vmatpush.xpose.msra.mxu0 0.0
    %1726 = vmatpush.xpose.msra.mxu0 0.0
    %1727 = vmatpush.xpose.msra.mxu0 0.0
    %1728 = vmatpush.xpose.msra.mxu0 0.0
    %1729 = vmatpush.xpose.msra.mxu0 0.0
    %1730 = vmatpush.xpose.msra.mxu0 0.0
    %1731 = vmatpush.xpose.msra.mxu0 0.0
    %1732 = vmatpush.xpose.msra.mxu0 0.0
    %1733 = vmatpush.xpose.msra.mxu0 0.0
    %1734 = vmatpush.xpose.msra.mxu0 0.0
    %1735 = vmatpush.xpose.msra.mxu0 0.0
    %1736 = vmatpush.xpose.msra.mxu0 0.0
    %1737 = vmatpush.xpose.msra.mxu0 0.0
    %1738 = vmatpush.xpose.msra.mxu0 %v1722
    %1739 = vmatpush.xpose.msra.mxu0 %v1720
    %1740 = vmatmul.f32.gmra.mxu0 %v1716
    %v1741 = vpop.f32.mrf.mxu0
    %v1742 = vadd.f32 0.0, %v1741
    %1743 = vmatmul.f32.gmra.mxu0 %v1718
    %v1744 = vpop.f32.mrf.mxu0
    %v1745 = vadd.f32 0.0, %v1744
    %1746 = vdwg.mxu0
    %v1747 = vmul.f32 %v1742, 0.25
    %v1748 = vmul.f32 %v1745, 0.25
    %v1749 = vsel %vm248, %v1747, -inf
    %1750 = vmax.xlane.f32.xlu0 %v1749
    %v1751 = vpop.xlane.xlu0 %1750
    %v1752 = vsel %vm248, %v1748, -inf
    %1753 = vmax.xlane.f32.xlu0 %v1752
    %v1754 = vpop.xlane.xlu0 %1753
    %v1755 = vsub.f32 %v1747, %v1751
    %v1756 = vsub.f32 %v1748, %v1754
    %v1757 = vmul.f32 %v1755, 1.442695
    %v1758 = vpow.pop %v1757
    %v1759 = vmul.f32 %v1756, 1.442695
    %v1760 = vpow.pop %v1759
    %v1761 = vsel %vm248, %v1758, 0.0
    %1762 = vadd.xlane.f32.xlu0 %v1761
    %v1763 = vpop.xlane.xlu0 %1762
    %v1764 = vsel %vm248, %v1760, 0.0
    %1765 = vadd.xlane.f32.xlu0 %v1764
    %v1766 = vpop.xlane.xlu0 %1765
    %v1767 = vrcp.pop %v1763
    %v1768 = vrcp.pop %v1766
    %v1769 = vmul.f32 %v1758, %v1767
    %v1770 = vmul.f32 %v1760, %v1768
    %1771 = vrot.lane.b32.xlu0 %v1403, 48
    %v1772 = vpop.permute.xlu0 %1771
    %1773 = vrot.lane.b32.xlu0 %v1406, 48
    %v1774 = vpop.permute.xlu0 %1773
    %v1778 = vsel %vm248, %v1769, 0
    %v1781 = vsel %vm248, %v1770, 0
    %1783 = vmatpush.msra.mxu0 0.0
    %1784 = vmatpush.msra.mxu0 0.0
    %1785 = vmatpush.msra.mxu0 0.0
    %1786 = vmatpush.msra.mxu0 0.0
    %1787 = vmatpush.msra.mxu0 0.0
    %1788 = vmatpush.msra.mxu0 0.0
    %1789 = vmatpush.msra.mxu0 0.0
    %1790 = vmatpush.msra.mxu0 0.0
    %1791 = vmatpush.msra.mxu0 0.0
    %1792 = vmatpush.msra.mxu0 0.0
    %1793 = vmatpush.msra.mxu0 0.0
    %1794 = vmatpush.msra.mxu0 0.0
    %1795 = vmatpush.msra.mxu0 0.0
    %1796 = vmatpush.msra.mxu0 0.0
    %1797 = vmatpush.msra.mxu0 %v1774
    %1798 = vmatpush.msra.mxu0 %v1772
    %1799 = vmatmul.f32.gmra.mxu0 %v1778
    %v1800 = vpop.f32.mrf.mxu0
    %v1801 = vadd.f32 0.0, %v1800
    %1802 = vmatmul.f32.gmra.mxu0 %v1781
    %v1803 = vpop.f32.mrf.mxu0
    %v1804 = vadd.f32 0.0, %v1803
    %1805 = vdwg.mxu0
    %1808 = vrot.lane.b32.xlu0 %v1801, 16
    %v1809 = vpop.permute.xlu0 %1808
    %1810 = vrot.lane.b32.xlu0 %v1804, 16
    %v1811 = vpop.permute.xlu0 %1810
    %v1814 = vsel %vm248, %v1703, %v1809
    %v1815 = vsel %vm248, %v1706, %v1811
    %s1816 = scalar_lea.vmem [#allocation5], 32
    %v1817 = vld [vmem:[%s1816] sm:$0xff]
    %v1818 = vld [vmem:[%s1816 + $0x8] sm:$0xff]
    %v1819 = vld [vmem:[%s1816 + $0x10] sm:$0xff]
    %v1820 = vld [vmem:[%s1816 + $0x18] sm:$0xff]
    %v1822 = vsel %vm655, %v1610, 0
    %v1825 = vsel %vm655, %v1611, 0
    %v1828 = vsel %vm655, %v1814, 0
    %v1831 = vsel %vm655, %v1815, 0
    %1833 = vmatpush.msra.mxu0 0.0
    %1834 = vmatpush.msra.mxu0 0.0
    %1835 = vmatpush.msra.mxu0 0.0
    %1836 = vmatpush.msra.mxu0 0.0
    %1837 = vmatpush.msra.mxu0 0.0
    %1838 = vmatpush.msra.mxu0 0.0
    %1839 = vmatpush.msra.mxu0 0.0
    %1840 = vmatpush.msra.mxu0 0.0
    %1841 = vmatpush.msra.mxu0 0.0
    %1842 = vmatpush.msra.mxu0 0.0
    %1843 = vmatpush.msra.mxu0 0.0
    %1844 = vmatpush.msra.mxu0 0.0
    %1845 = vmatpush.msra.mxu0 %v1820
    %1846 = vmatpush.msra.mxu0 %v1819
    %1847 = vmatpush.msra.mxu0 %v1818
    %1848 = vmatpush.msra.mxu0 %v1817
    %1849 = vmatmul.f32.gmra.mxu0 %v1822
    %v1850 = vpop.f32.mrf.mxu0
    %v1851 = vadd.f32 0.0, %v1850
    %1852 = vmatmul.f32.gmra.mxu0 %v1825
    %v1853 = vpop.f32.mrf.mxu0
    %v1854 = vadd.f32 0.0, %v1853
    %1855 = vmatmul.f32.gmra.mxu0 %v1828
    %v1856 = vpop.f32.mrf.mxu0
    %v1857 = vadd.f32 0.0, %v1856
    %1858 = vmatmul.f32.gmra.mxu0 %v1831
    %v1859 = vpop.f32.mrf.mxu0
    %v1860 = vadd.f32 0.0, %v1859
    %1861 = vdwg.mxu0
    %v1862 = vmul.f32 %v1851, 0.5
    %v1863 = vmul.f32 %v1854, 0.5
    %v1864 = vmul.f32 %v1857, 0.5
    %v1865 = vmul.f32 %v1860, 0.5
    %v1866 = vadd.f32 %v1862, %v1248
    %v1867 = vadd.f32 %v1863, %v1249
    %v1868 = vadd.f32 %v1864, %v1250
    %v1869 = vadd.f32 %v1865, %v1251
    %1870 = vmatpush.msra.mxu0 0.0
    %1871 = vmatpush.msra.mxu0 0.0
    %1872 = vmatpush.msra.mxu0 0.0
    %1873 = vmatpush.msra.mxu0 0.0
    %1874 = vmatpush.msra.mxu0 0.0
    %1875 = vmatpush.msra.mxu0 0.0
    %1876 = vmatpush.msra.mxu0 0.0
    %1877 = vmatpush.msra.mxu0 0.0
    %1878 = vmatpush.msra.mxu0 0.0
    %1879 = vmatpush.msra.mxu0 0.0
    %1880 = vmatpush.msra.mxu0 0.0
    %1881 = vmatpush.msra.mxu0 0.0
    %1882 = vmatpush.msra.mxu0 %v1869
    %1883 = vmatpush.msra.mxu0 %v1868
    %1884 = vmatpush.msra.mxu0 %v1867
    %1885 = vmatpush.msra.mxu0 %v1866
    %1886 = vmatmul.f32.gmra.mxu0 %v706
    %v1887 = vpop.f32.mrf.mxu0
    %v1888 = vadd.f32 0.0, %v1887
    %1889 = vmatmul.f32.gmra.mxu0 %v709
    %v1890 = vpop.f32.mrf.mxu0
    %v1891 = vadd.f32 0.0, %v1890
    %1892 = vmatmul.f32.gmra.mxu0 %v712
    %v1893 = vpop.f32.mrf.mxu0
    %v1894 = vadd.f32 0.0, %v1893
    %1895 = vmatmul.f32.gmra.mxu0 %v715
    %v1896 = vpop.f32.mrf.mxu0
    %v1897 = vadd.f32 0.0, %v1896
    %1898 = vdwg.mxu0
    %v1899 = vmul.f32 %v1888, 1e-10
    %v1900 = vmul.f32 %v1891, 1e-10
    %v1901 = vmul.f32 %v1894, 1e-10
    %v1902 = vmul.f32 %v1897, 1e-10
    %v1903 = vsub.f32 %v1866, %v1899
    %v1904 = vsub.f32 %v1867, %v1900
    %v1905 = vsub.f32 %v1868, %v1901
    %v1906 = vsub.f32 %v1869, %v1902
    %1907 = vmatpush.msra.mxu0 0.0
    %1908 = vmatpush.msra.mxu0 0.0
    %1909 = vmatpush.msra.mxu0 0.0
    %1910 = vmatpush.msra.mxu0 0.0
    %1911 = vmatpush.msra.mxu0 0.0
    %1912 = vmatpush.msra.mxu0 0.0
    %1913 = vmatpush.msra.mxu0 0.0
    %1914 = vmatpush.msra.mxu0 0.0
    %1915 = vmatpush.msra.mxu0 0.0
    %1916 = vmatpush.msra.mxu0 0.0
    %1917 = vmatpush.msra.mxu0 0.0
    %1918 = vmatpush.msra.mxu0 0.0
    %1919 = vmatpush.msra.mxu0 %v1906
    %1920 = vmatpush.msra.mxu0 %v1905
    %1921 = vmatpush.msra.mxu0 %v1904
    %1922 = vmatpush.msra.mxu0 %v1903
    %1923 = vmatmul.f32.gmra.mxu0 %v706
    %v1924 = vpop.f32.mrf.mxu0
    %v1925 = vadd.f32 0.0, %v1924
    %1926 = vmatmul.f32.gmra.mxu0 %v709
    %v1927 = vpop.f32.mrf.mxu0
    %v1928 = vadd.f32 0.0, %v1927
    %1929 = vmatmul.f32.gmra.mxu0 %v712
    %v1930 = vpop.f32.mrf.mxu0
    %v1931 = vadd.f32 0.0, %v1930
    %1932 = vmatmul.f32.gmra.mxu0 %v715
    %v1933 = vpop.f32.mrf.mxu0
    %v1934 = vadd.f32 0.0, %v1933
    %1935 = vdwg.mxu0
    %v1936 = vsub.f32 %v1925, %v1903
    %v1937 = vsub.f32 %v1928, %v1904
    %v1938 = vsub.f32 %v1931, %v1905
    %v1939 = vsub.f32 %v1934, %v1906
    %v1940 = vmul.f32 %v1936, %v1936
    %v1941 = vmul.f32 %v1937, %v1937
    %v1942 = vmul.f32 %v1938, %v1938
    %v1943 = vmul.f32 %v1939, %v1939
    %v1944 = vsel %vm83, %v1940, 0.0
    %1945 = vadd.xlane.f32.xlu0 %v1944
    %v1946 = vpop.xlane.xlu0 %1945
    %v1947 = vsel %vm83, %v1941, 0.0
    %1948 = vadd.xlane.f32.xlu0 %v1947
    %v1949 = vpop.xlane.xlu0 %1948
    %v1950 = vsel %vm83, %v1942, 0.0
    %1951 = vadd.xlane.f32.xlu0 %v1950
    %v1952 = vpop.xlane.xlu0 %1951
    %v1953 = vsel %vm83, %v1943, 0.0
    %1954 = vadd.xlane.f32.xlu0 %v1953
    %v1955 = vpop.xlane.xlu0 %1954
    %v1956 = vrsqrt.pop %v1946
    %v1957 = vmul.f32 %v1956, %v1946
    %v1958 = vmul.f32 %v1957, %v1956
    %v1959 = vmul.f32 0.5, %v1958
    %v1960 = vsub.f32 1.5, %v1959
    %v1961 = vmul.f32 %v1956, %v1960
    %v1962 = vmul.f32 %v1946, %v1961
    %vm1963 = vcmp.eq.f32.partialorder %v1946, inf
    %v1964 = vsel %vm1963, %v1946, %v1962
    %vm1965 = vcmp.eq.f32.partialorder %v1946, 0.0
    %v1966 = vand.u32 %v1946, 2147483648
    %v1967 = vsel %vm1965, %v1966, %v1964
    %v1968 = vrsqrt.pop %v1949
    %v1969 = vmul.f32 %v1968, %v1949
    %v1970 = vmul.f32 %v1969, %v1968
    %v1971 = vmul.f32 0.5, %v1970
    %v1972 = vsub.f32 1.5, %v1971
    %v1973 = vmul.f32 %v1968, %v1972
    %v1974 = vmul.f32 %v1949, %v1973
    %vm1975 = vcmp.eq.f32.partialorder %v1949, inf
    %v1976 = vsel %vm1975, %v1949, %v1974
    %vm1977 = vcmp.eq.f32.partialorder %v1949, 0.0
    %v1978 = vand.u32 %v1949, 2147483648
    %v1979 = vsel %vm1977, %v1978, %v1976
    %v1980 = vrsqrt.pop %v1952
    %v1981 = vmul.f32 %v1980, %v1952
    %v1982 = vmul.f32 %v1981, %v1980
    %v1983 = vmul.f32 0.5, %v1982
    %v1984 = vsub.f32 1.5, %v1983
    %v1985 = vmul.f32 %v1980, %v1984
    %v1986 = vmul.f32 %v1952, %v1985
    %vm1987 = vcmp.eq.f32.partialorder %v1952, inf
    %v1988 = vsel %vm1987, %v1952, %v1986
    %vm1989 = vcmp.eq.f32.partialorder %v1952, 0.0
    %v1990 = vand.u32 %v1952, 2147483648
    %v1991 = vsel %vm1989, %v1990, %v1988
    %v1992 = vrsqrt.pop %v1955
    %v1993 = vmul.f32 %v1992, %v1955
    %v1994 = vmul.f32 %v1993, %v1992
    %v1995 = vmul.f32 0.5, %v1994
    %v1996 = vsub.f32 1.5, %v1995
    %v1997 = vmul.f32 %v1992, %v1996
    %v1998 = vmul.f32 %v1955, %v1997
    %vm1999 = vcmp.eq.f32.partialorder %v1955, inf
    %v2000 = vsel %vm1999, %v1955, %v1998
    %vm2001 = vcmp.eq.f32.partialorder %v1955, 0.0
    %v2002 = vand.u32 %v1955, 2147483648
    %v2003 = vsel %vm2001, %v2002, %v2000
    %v2004 = vadd.f32 %v1967, 1e-10
    %v2005 = vadd.f32 %v1979, 1e-10
    %v2006 = vadd.f32 %v1991, 1e-10
    %v2007 = vadd.f32 %v2003, 1e-10
    %v2008 = vrcp.pop %v2004
    %v2009 = vmul.f32 %v2004, %v2008
    %v2010 = vsub.f32 1.0, %v2009
    %v2011 = vmul.f32 %v2008, %v2010
    %v2012 = vadd.f32 %v2008, %v2011
    %vm2013 = vweird.f32 %v2004
    %vm2014 = vweird.f32 %v2008
    %vm2015 = vmor %vm2013, %vm2014
    %v2016 = vsel %vm2015, %v2008, %v2012
    %v2017 = vand.u32 2147483647, %v2004
    %vm2018 = vcmp.eq.f32.partialorder %v2017, 8.507059e+37
    %v2019 = vand.u32 %v2004, 2147483648
    %v2020 = vor.u32 1.1754944e-38, %v2019
    %v2021 = vsel %vm2018, %v2020, %v2016
    %v2022 = vmul.f32 %v1936, %v2021
    %v2023 = vrcp.pop %v2005
    %v2024 = vmul.f32 %v2005, %v2023
    %v2025 = vsub.f32 1.0, %v2024
    %v2026 = vmul.f32 %v2023, %v2025
    %v2027 = vadd.f32 %v2023, %v2026
    %vm2028 = vweird.f32 %v2005
    %vm2029 = vweird.f32 %v2023
    %vm2030 = vmor %vm2028, %vm2029
    %v2031 = vsel %vm2030, %v2023, %v2027
    %v2032 = vand.u32 2147483647, %v2005
    %vm2033 = vcmp.eq.f32.partialorder %v2032, 8.507059e+37
    %v2034 = vand.u32 %v2005, 2147483648
    %v2035 = vor.u32 1.1754944e-38, %v2034
    %v2036 = vsel %vm2033, %v2035, %v2031
    %v2037 = vmul.f32 %v1937, %v2036
    %v2038 = vrcp.pop %v2006
    %v2039 = vmul.f32 %v2006, %v2038
    %v2040 = vsub.f32 1.0, %v2039
    %v2041 = vmul.f32 %v2038, %v2040
    %v2042 = vadd.f32 %v2038, %v2041
    %vm2043 = vweird.f32 %v2006
    %vm2044 = vweird.f32 %v2038
    %vm2045 = vmor %vm2043, %vm2044
    %v2046 = vsel %vm2045, %v2038, %v2042
    %v2047 = vand.u32 2147483647, %v2006
    %vm2048 = vcmp.eq.f32.partialorder %v2047, 8.507059e+37
    %v2049 = vand.u32 %v2006, 2147483648
    %v2050 = vor.u32 1.1754944e-38, %v2049
    %v2051 = vsel %vm2048, %v2050, %v2046
    %v2052 = vmul.f32 %v1938, %v2051
    %v2053 = vrcp.pop %v2007
    %v2054 = vmul.f32 %v2007, %v2053
    %v2055 = vsub.f32 1.0, %v2054
    %v2056 = vmul.f32 %v2053, %v2055
    %v2057 = vadd.f32 %v2053, %v2056
    %vm2058 = vweird.f32 %v2007
    %vm2059 = vweird.f32 %v2053
    %vm2060 = vmor %vm2058, %vm2059
    %v2061 = vsel %vm2060, %v2053, %v2057
    %v2062 = vand.u32 2147483647, %v2007
    %vm2063 = vcmp.eq.f32.partialorder %v2062, 8.507059e+37
    %v2064 = vand.u32 %v2007, 2147483648
    %v2065 = vor.u32 1.1754944e-38, %v2064
    %v2066 = vsel %vm2063, %v2065, %v2061
    %v2067 = vmul.f32 %v1939, %v2066
    %2068 = vmatpush.msra.mxu0 0.0
    %2069 = vmatpush.msra.mxu0 0.0
    %2070 = vmatpush.msra.mxu0 0.0
    %2071 = vmatpush.msra.mxu0 0.0
    %2072 = vmatpush.msra.mxu0 0.0
    %2073 = vmatpush.msra.mxu0 0.0
    %2074 = vmatpush.msra.mxu0 0.0
    %2075 = vmatpush.msra.mxu0 0.0
    %2076 = vmatpush.msra.mxu0 0.0
    %2077 = vmatpush.msra.mxu0 0.0
    %2078 = vmatpush.msra.mxu0 0.0
    %2079 = vmatpush.msra.mxu0 0.0
    %2080 = vmatpush.msra.mxu0 %v2067
    %2081 = vmatpush.msra.mxu0 %v2052
    %2082 = vmatpush.msra.mxu0 %v2037
    %2083 = vmatpush.msra.mxu0 %v2022
    %2084 = vmatmul.f32.gmra.mxu0 %v916
    %v2085 = vpop.f32.mrf.mxu0
    %v2086 = vadd.f32 0.0, %v2085
    %2087 = vmatmul.f32.gmra.mxu0 %v919
    %v2088 = vpop.f32.mrf.mxu0
    %v2089 = vadd.f32 0.0, %v2088
    %2090 = vmatmul.f32.gmra.mxu0 %v922
    %v2091 = vpop.f32.mrf.mxu0
    %v2092 = vadd.f32 0.0, %v2091
    %2093 = vmatmul.f32.gmra.mxu0 %v925
    %v2094 = vpop.f32.mrf.mxu0
    %v2095 = vadd.f32 0.0, %v2094
    %2096 = vdwg.mxu0
    %v2097 = vsub.f32 %v1866, %v2086
    %v2098 = vsub.f32 %v1867, %v2089
    %v2099 = vsub.f32 %v1868, %v2092
    %v2100 = vsub.f32 %v1869, %v2095
    %s2101 = scalar_lea.vmem %s7, 64
    %v2102 = vld [vmem:[%s2101] sm:$0xff]
    %v2103 = vld [vmem:[%s2101 + $0x8] sm:$0xff]
    %v2104 = vld [vmem:[%s2101 + $0x10] sm:$0xff]
    %v2105 = vld [vmem:[%s2101 + $0x18] sm:$0xff]
    %v2106 = vld [vmem:[%s2101 + $0x20] sm:$0xff]
    %v2107 = vld [vmem:[%s2101 + $0x28] sm:$0xff]
    %v2108 = vld [vmem:[%s2101 + $0x30] sm:$0xff]
    %v2109 = vld [vmem:[%s2101 + $0x38] sm:$0xff]
    %s2110 = scalar_lea.vmem %s8, 1
    %v2111 = vld [vmem:[%s2110] sm:$0x1]
    %v2113 = vperm.slane %v2111, 0
    %v2116 = vsel %vm83, %v2097, 0
    %v2119 = vsel %vm83, %v2098, 0
    %v2122 = vsel %vm83, %v2099, 0
    %v2125 = vsel %vm83, %v2100, 0
    %2127 = vmatpush.msra.mxu0 0.0
    %2128 = vmatpush.msra.mxu0 0.0
    %2129 = vmatpush.msra.mxu0 0.0
    %2130 = vmatpush.msra.mxu0 0.0
    %2131 = vmatpush.msra.mxu0 0.0
    %2132 = vmatpush.msra.mxu0 0.0
    %2133 = vmatpush.msra.mxu0 0.0
    %2134 = vmatpush.msra.mxu0 0.0
    %2135 = vmatpush.msra.mxu0 %v2109
    %2136 = vmatpush.msra.mxu0 %v2108
    %2137 = vmatpush.msra.mxu0 %v2107
    %2138 = vmatpush.msra.mxu0 %v2106
    %2139 = vmatpush.msra.mxu0 %v2105
    %2140 = vmatpush.msra.mxu0 %v2104
    %2141 = vmatpush.msra.mxu0 %v2103
    %2142 = vmatpush.msra.mxu0 %v2102
    %2143 = vmatmul.f32.gmra.mxu0 %v2116
    %v2144 = vpop.f32.mrf.mxu0
    %v2145 = vadd.f32 %v2113, %v2144
    %2146 = vmatmul.f32.gmra.mxu0 %v2119
    %v2147 = vpop.f32.mrf.mxu0
    %v2148 = vadd.f32 %v2113, %v2147
    %2149 = vmatmul.f32.gmra.mxu0 %v2122
    %v2150 = vpop.f32.mrf.mxu0
    %v2151 = vadd.f32 %v2113, %v2150
    %2152 = vmatmul.f32.gmra.mxu0 %v2125
    %v2153 = vpop.f32.mrf.mxu0
    %v2154 = vadd.f32 %v2113, %v2153
    %2155 = vdwg.mxu0
    %v2156 = vmul.f32 %v2145, 0.5
    %v2157 = vmul.f32 %v2148, 0.5
    %v2158 = vmul.f32 %v2151, 0.5
    %v2159 = vmul.f32 %v2154, 0.5
    %v2160 = vadd.f32 %v2156, %v2097
    %v2161 = vadd.f32 %v2157, %v2098
    %v2162 = vadd.f32 %v2158, %v2099
    %v2163 = vadd.f32 %v2159, %v2100
    %2164 = vmatpush.msra.mxu0 0.0
    %2165 = vmatpush.msra.mxu0 0.0
    %2166 = vmatpush.msra.mxu0 0.0
    %2167 = vmatpush.msra.mxu0 0.0
    %2168 = vmatpush.msra.mxu0 0.0
    %2169 = vmatpush.msra.mxu0 0.0
    %2170 = vmatpush.msra.mxu0 0.0
    %2171 = vmatpush.msra.mxu0 0.0
    %2172 = vmatpush.msra.mxu0 0.0
    %2173 = vmatpush.msra.mxu0 0.0
    %2174 = vmatpush.msra.mxu0 0.0
    %2175 = vmatpush.msra.mxu0 0.0
    %2176 = vmatpush.msra.mxu0 %v2163
    %2177 = vmatpush.msra.mxu0 %v2162
    %2178 = vmatpush.msra.mxu0 %v2161
    %2179 = vmatpush.msra.mxu0 %v2160
    %2180 = vmatmul.f32.gmra.mxu0 %v706
    %v2181 = vpop.f32.mrf.mxu0
    %v2182 = vadd.f32 0.0, %v2181
    %2183 = vmatmul.f32.gmra.mxu0 %v709
    %v2184 = vpop.f32.mrf.mxu0
    %v2185 = vadd.f32 0.0, %v2184
    %2186 = vmatmul.f32.gmra.mxu0 %v712
    %v2187 = vpop.f32.mrf.mxu0
    %v2188 = vadd.f32 0.0, %v2187
    %2189 = vmatmul.f32.gmra.mxu0 %v715
    %v2190 = vpop.f32.mrf.mxu0
    %v2191 = vadd.f32 0.0, %v2190
    %2192 = vdwg.mxu0
    %v2193 = vmul.f32 %v2182, 1e-10
    %v2194 = vmul.f32 %v2185, 1e-10
    %v2195 = vmul.f32 %v2188, 1e-10
    %v2196 = vmul.f32 %v2191, 1e-10
    %v2197 = vsub.f32 %v2160, %v2193
    %v2198 = vsub.f32 %v2161, %v2194
    %v2199 = vsub.f32 %v2162, %v2195
    %v2200 = vsub.f32 %v2163, %v2196
    %2201 = vmatpush.msra.mxu0 0.0
    %2202 = vmatpush.msra.mxu0 0.0
    %2203 = vmatpush.msra.mxu0 0.0
    %2204 = vmatpush.msra.mxu0 0.0
    %2205 = vmatpush.msra.mxu0 0.0
    %2206 = vmatpush.msra.mxu0 0.0
    %2207 = vmatpush.msra.mxu0 0.0
    %2208 = vmatpush.msra.mxu0 0.0
    %2209 = vmatpush.msra.mxu0 0.0
    %2210 = vmatpush.msra.mxu0 0.0
    %2211 = vmatpush.msra.mxu0 0.0
    %2212 = vmatpush.msra.mxu0 0.0
    %2213 = vmatpush.msra.mxu0 %v2200
    %2214 = vmatpush.msra.mxu0 %v2199
    %2215 = vmatpush.msra.mxu0 %v2198
    %2216 = vmatpush.msra.mxu0 %v2197
    %2217 = vmatmul.f32.gmra.mxu0 %v706
    %v2218 = vpop.f32.mrf.mxu0
    %v2219 = vadd.f32 0.0, %v2218
    %2220 = vmatmul.f32.gmra.mxu0 %v709
    %v2221 = vpop.f32.mrf.mxu0
    %v2222 = vadd.f32 0.0, %v2221
    %2223 = vmatmul.f32.gmra.mxu0 %v712
    %v2224 = vpop.f32.mrf.mxu0
    %v2225 = vadd.f32 0.0, %v2224
    %2226 = vmatmul.f32.gmra.mxu0 %v715
    %v2227 = vpop.f32.mrf.mxu0
    %v2228 = vadd.f32 0.0, %v2227
    %2229 = vdwg.mxu0
    %v2230 = vsub.f32 %v2219, %v2197
    %v2231 = vsub.f32 %v2222, %v2198
    %v2232 = vsub.f32 %v2225, %v2199
    %v2233 = vsub.f32 %v2228, %v2200
    %v2234 = vmul.f32 %v2230, %v2230
    %v2235 = vmul.f32 %v2231, %v2231
    %v2236 = vmul.f32 %v2232, %v2232
    %v2237 = vmul.f32 %v2233, %v2233
    %v2238 = vsel %vm83, %v2234, 0.0
    %2239 = vadd.xlane.f32.xlu0 %v2238
    %v2240 = vpop.xlane.xlu0 %2239
    %v2241 = vsel %vm83, %v2235, 0.0
    %2242 = vadd.xlane.f32.xlu0 %v2241
    %v2243 = vpop.xlane.xlu0 %2242
    %v2244 = vsel %vm83, %v2236, 0.0
    %2245 = vadd.xlane.f32.xlu0 %v2244
    %v2246 = vpop.xlane.xlu0 %2245
    %v2247 = vsel %vm83, %v2237, 0.0
    %2248 = vadd.xlane.f32.xlu0 %v2247
    %v2249 = vpop.xlane.xlu0 %2248
    %v2250 = vrsqrt.pop %v2240
    %v2251 = vmul.f32 %v2250, %v2240
    %v2252 = vmul.f32 %v2251, %v2250
    %v2253 = vmul.f32 0.5, %v2252
    %v2254 = vsub.f32 1.5, %v2253
    %v2255 = vmul.f32 %v2250, %v2254
    %v2256 = vmul.f32 %v2240, %v2255
    %vm2257 = vcmp.eq.f32.partialorder %v2240, inf
    %v2258 = vsel %vm2257, %v2240, %v2256
    %vm2259 = vcmp.eq.f32.partialorder %v2240, 0.0
    %v2260 = vand.u32 %v2240, 2147483648
    %v2261 = vsel %vm2259, %v2260, %v2258
    %v2262 = vrsqrt.pop %v2243
    %v2263 = vmul.f32 %v2262, %v2243
    %v2264 = vmul.f32 %v2263, %v2262
    %v2265 = vmul.f32 0.5, %v2264
    %v2266 = vsub.f32 1.5, %v2265
    %v2267 = vmul.f32 %v2262, %v2266
    %v2268 = vmul.f32 %v2243, %v2267
    %vm2269 = vcmp.eq.f32.partialorder %v2243, inf
    %v2270 = vsel %vm2269, %v2243, %v2268
    %vm2271 = vcmp.eq.f32.partialorder %v2243, 0.0
    %v2272 = vand.u32 %v2243, 2147483648
    %v2273 = vsel %vm2271, %v2272, %v2270
    %v2274 = vrsqrt.pop %v2246
    %v2275 = vmul.f32 %v2274, %v2246
    %v2276 = vmul.f32 %v2275, %v2274
    %v2277 = vmul.f32 0.5, %v2276
    %v2278 = vsub.f32 1.5, %v2277
    %v2279 = vmul.f32 %v2274, %v2278
    %v2280 = vmul.f32 %v2246, %v2279
    %vm2281 = vcmp.eq.f32.partialorder %v2246, inf
    %v2282 = vsel %vm2281, %v2246, %v2280
    %vm2283 = vcmp.eq.f32.partialorder %v2246, 0.0
    %v2284 = vand.u32 %v2246, 2147483648
    %v2285 = vsel %vm2283, %v2284, %v2282
    %v2286 = vrsqrt.pop %v2249
    %v2287 = vmul.f32 %v2286, %v2249
    %v2288 = vmul.f32 %v2287, %v2286
    %v2289 = vmul.f32 0.5, %v2288
    %v2290 = vsub.f32 1.5, %v2289
    %v2291 = vmul.f32 %v2286, %v2290
    %v2292 = vmul.f32 %v2249, %v2291
    %vm2293 = vcmp.eq.f32.partialorder %v2249, inf
    %v2294 = vsel %vm2293, %v2249, %v2292
    %vm2295 = vcmp.eq.f32.partialorder %v2249, 0.0
    %v2296 = vand.u32 %v2249, 2147483648
    %v2297 = vsel %vm2295, %v2296, %v2294
    %v2298 = vadd.f32 %v2261, 1e-10
    %v2299 = vadd.f32 %v2273, 1e-10
    %v2300 = vadd.f32 %v2285, 1e-10
    %v2301 = vadd.f32 %v2297, 1e-10
    %v2302 = vrcp.pop %v2298
    %v2303 = vmul.f32 %v2298, %v2302
    %v2304 = vsub.f32 1.0, %v2303
    %v2305 = vmul.f32 %v2302, %v2304
    %v2306 = vadd.f32 %v2302, %v2305
    %vm2307 = vweird.f32 %v2298
    %vm2308 = vweird.f32 %v2302
    %vm2309 = vmor %vm2307, %vm2308
    %v2310 = vsel %vm2309, %v2302, %v2306
    %v2311 = vand.u32 2147483647, %v2298
    %vm2312 = vcmp.eq.f32.partialorder %v2311, 8.507059e+37
    %v2313 = vand.u32 %v2298, 2147483648
    %v2314 = vor.u32 1.1754944e-38, %v2313
    %v2315 = vsel %vm2312, %v2314, %v2310
    %v2316 = vmul.f32 %v2230, %v2315
    %v2317 = vrcp.pop %v2299
    %v2318 = vmul.f32 %v2299, %v2317
    %v2319 = vsub.f32 1.0, %v2318
    %v2320 = vmul.f32 %v2317, %v2319
    %v2321 = vadd.f32 %v2317, %v2320
    %vm2322 = vweird.f32 %v2299
    %vm2323 = vweird.f32 %v2317
    %vm2324 = vmor %vm2322, %vm2323
    %v2325 = vsel %vm2324, %v2317, %v2321
    %v2326 = vand.u32 2147483647, %v2299
    %vm2327 = vcmp.eq.f32.partialorder %v2326, 8.507059e+37
    %v2328 = vand.u32 %v2299, 2147483648
    %v2329 = vor.u32 1.1754944e-38, %v2328
    %v2330 = vsel %vm2327, %v2329, %v2325
    %v2331 = vmul.f32 %v2231, %v2330
    %v2332 = vrcp.pop %v2300
    %v2333 = vmul.f32 %v2300, %v2332
    %v2334 = vsub.f32 1.0, %v2333
    %v2335 = vmul.f32 %v2332, %v2334
    %v2336 = vadd.f32 %v2332, %v2335
    %vm2337 = vweird.f32 %v2300
    %vm2338 = vweird.f32 %v2332
    %vm2339 = vmor %vm2337, %vm2338
    %v2340 = vsel %vm2339, %v2332, %v2336
    %v2341 = vand.u32 2147483647, %v2300
    %vm2342 = vcmp.eq.f32.partialorder %v2341, 8.507059e+37
    %v2343 = vand.u32 %v2300, 2147483648
    %v2344 = vor.u32 1.1754944e-38, %v2343
    %v2345 = vsel %vm2342, %v2344, %v2340
    %v2346 = vmul.f32 %v2232, %v2345
    %v2347 = vrcp.pop %v2301
    %v2348 = vmul.f32 %v2301, %v2347
    %v2349 = vsub.f32 1.0, %v2348
    %v2350 = vmul.f32 %v2347, %v2349
    %v2351 = vadd.f32 %v2347, %v2350
    %vm2352 = vweird.f32 %v2301
    %vm2353 = vweird.f32 %v2347
    %vm2354 = vmor %vm2352, %vm2353
    %v2355 = vsel %vm2354, %v2347, %v2351
    %v2356 = vand.u32 2147483647, %v2301
    %vm2357 = vcmp.eq.f32.partialorder %v2356, 8.507059e+37
    %v2358 = vand.u32 %v2301, 2147483648
    %v2359 = vor.u32 1.1754944e-38, %v2358
    %v2360 = vsel %vm2357, %v2359, %v2355
    %v2361 = vmul.f32 %v2233, %v2360
    %2362 = vmatpush.msra.mxu0 0.0
    %2363 = vmatpush.msra.mxu0 0.0
    %2364 = vmatpush.msra.mxu0 0.0
    %2365 = vmatpush.msra.mxu0 0.0
    %2366 = vmatpush.msra.mxu0 0.0
    %2367 = vmatpush.msra.mxu0 0.0
    %2368 = vmatpush.msra.mxu0 0.0
    %2369 = vmatpush.msra.mxu0 0.0
    %2370 = vmatpush.msra.mxu0 0.0
    %2371 = vmatpush.msra.mxu0 0.0
    %2372 = vmatpush.msra.mxu0 0.0
    %2373 = vmatpush.msra.mxu0 0.0
    %2374 = vmatpush.msra.mxu0 %v2361
    %2375 = vmatpush.msra.mxu0 %v2346
    %2376 = vmatpush.msra.mxu0 %v2331
    %2377 = vmatpush.msra.mxu0 %v2316
    %2378 = vmatmul.f32.gmra.mxu0 %v916
    %v2379 = vpop.f32.mrf.mxu0
    %v2380 = vadd.f32 0.0, %v2379
    %2381 = vmatmul.f32.gmra.mxu0 %v919
    %v2382 = vpop.f32.mrf.mxu0
    %v2383 = vadd.f32 0.0, %v2382
    %2384 = vmatmul.f32.gmra.mxu0 %v922
    %v2385 = vpop.f32.mrf.mxu0
    %v2386 = vadd.f32 0.0, %v2385
    %2387 = vmatmul.f32.gmra.mxu0 %v925
    %v2388 = vpop.f32.mrf.mxu0
    %v2389 = vadd.f32 0.0, %v2388
    %2390 = vdwg.mxu0
    %v2391 = vsub.f32 %v2160, %v2380
    %v2392 = vsub.f32 %v2161, %v2383
    %v2393 = vsub.f32 %v2162, %v2386
    %v2394 = vsub.f32 %v2163, %v2389
    %2395 = vst.msk [vmem:[#allocation7] sm:$0xff] %vm83, %v2391
    %2396 = vst.msk [vmem:[#allocation7 + $0x8] sm:$0xff] %vm83, %v2392
    %2397 = vst.msk [vmem:[#allocation7 + $0x10] sm:$0xff] %vm83, %v2393
    %2398 = vst.msk [vmem:[#allocation7 + $0x18] sm:$0xff] %vm83, %v2394
    // Predicated region
    $region46: #{transformer_d.1} parent=1 // pred_check
      _
    $region47: #{transformer_d.1} parent=1 // pred_check_branch
      %2400 = sbr.rel (0) target = $region49
    $region48: #{transformer_d.1} parent=1 // pred_region
      %2402 = vsyncadd [#allocation4], 0
      %s2403 = sshll.u32 [#allocation7], 4
      %s2404 = int_to_ptr.vmem [resolvable:$true] %s2403
      %s2405 = sshll.u32 %s9, 4
      %s2406 = int_to_ptr.hbm [resolvable:$true] %s2405
      %2411 = dma.vmem_to_hbm [thread:$0]  %s2404, 512, %s2406, [#allocation4], 128, 128, 8
    $region49: #{transformer_d.1} parent=1 // pred_fallthru
      _
    // Predicated region
    $region50: #{transformer_d.1} parent=1 // pred_check
      _
    $region51: #{transformer_d.1} parent=1 // pred_check_branch
      %2413 = sbr.rel (0) target = $region53
    $region52: #{transformer_d.1} parent=1 // pred_region
      %2415 = dma.done [#allocation4], 512
    $region53: #{transformer_d.1} parent=1 // pred_fallthru
      _
    %2416 = vsyncpa [#allocation3], 1
    %2417 = vsyncpa [#allocation6], 1
    %2418 = vsyncpa [#allocation4], 1

</llo_original>
